<compile_context>
chip_gen: v5e
topology: v5e:2x2
jax: 0.10.0
libtpu: 0.0.40
codegen_flags: <defaults>
</compile_context>

<pallas_src>
import functools

import jax
import jax.numpy as jnp
from jax.experimental import pallas as pl
from jax.experimental.pallas import tpu as pltpu


# ---------------------------------------------------------------------------
# VMEM budgeting (per-generation): v5e/v6e have 128 MiB physical, v7x 64 MiB/TC.
# ---------------------------------------------------------------------------
def _vmem_limit_bytes():
    cap = 64 << 20  # conservative (v7x-safe) fallback
    try:
        cap = int(getattr(pltpu.get_tpu_info(), "vmem_capacity_bytes", cap))
    except Exception:
        pass
    try:
        if "v7" in jax.devices()[0].device_kind.lower():
            cap = min(cap, 64 << 20)
    except Exception:
        pass
    # use ~half of physical VMEM as the scoped limit for the streaming kernels
    return max(32 << 20, min(cap // 2, 64 << 20))


def _tile_candidates(dim, lane=128):
    """Tile sizes dividing `dim`: the full dim plus lane-multiples, descending."""
    cands = {dim}
    t = lane
    while t < dim:
        if dim % t == 0:
            cands.add(t)
        t += lane
    return sorted(cands, reverse=True)


def _tile_vmem_bytes(tm, tk, tn, itemsize=4):
    """Estimate scoped VMEM for one grid step (default double buffering)."""
    nbuf = 2
    x_b = tm * tk * itemsize * nbuf
    w_b = tk * tn * itemsize * nbuf
    b_b = 8 * tn * itemsize * nbuf      # (1, tn) bias pads to 8 sublanes
    o_b = tm * tn * itemsize * nbuf
    acc = tm * tn * 4                   # f32 accumulator scratch
    return x_b + w_b + b_b + o_b + acc


def _choose_tiles(M, K, N, budget_bytes):
    """Largest (tk, tn) fitting the VMEM budget; keep >=2 N tiles for wide layers
    so both v7x TensorCores get a 'parallel' shard of the weight stream."""
    tm = M
    n_cands = _tile_candidates(N)
    if N >= 2048:
        n_cands = [t for t in n_cands if t < N] or [N]
    k_cands = _tile_candidates(K)
    for tn in n_cands:
        for tk in k_cands:
            if _tile_vmem_bytes(tm, tk, tn) <= budget_bytes:
                return tm, tk, tn
    return tm, k_cands[-1], n_cands[-1]


# ---------------------------------------------------------------------------
# Tiled weight-streaming kernel: o = leaky?(x @ w + b)
# ---------------------------------------------------------------------------
def _fused_linear_kernel(x_ref, w_ref, b_ref, o_ref, acc_ref, *, apply_leaky, slope):
    k = pl.program_id(2)

    @pl.when(k == 0)
    def _():
        # init accumulator with the broadcast bias (saves an epilogue add)
        acc_ref[...] = jnp.broadcast_to(b_ref[...], acc_ref.shape).astype(jnp.float32)

    acc_ref[...] += jnp.dot(
        x_ref[...], w_ref[...], preferred_element_type=jnp.float32
    )

    @pl.when(k == pl.num_programs(2) - 1)
    def _():
        y = acc_ref[...]
        if apply_leaky:
            y = jnp.where(y > 0, y, slope * y)
        o_ref[...] = y.astype(o_ref.dtype)


def fused_linear(x, w, b, *, apply_leaky, slope=0.01, vmem_limit=None):
    """o = (x @ w + b), optionally LeakyReLU.  x:(M,K), w:(K,N) BN-folded, b:(N,)."""
    M, K = x.shape
    Kw, N = w.shape
    assert K == Kw
    if vmem_limit is None:
        vmem_limit = _vmem_limit_bytes()
    budget = int(vmem_limit * 0.75)
    tm, tk, tn = _choose_tiles(M, K, N, budget)
    b2 = b.reshape(1, N)

    grid = (pl.cdiv(M, tm), pl.cdiv(N, tn), pl.cdiv(K, tk))
    kernel = functools.partial(
        _fused_linear_kernel, apply_leaky=apply_leaky, slope=slope
    )

    return pl.pallas_call(
        kernel,
        out_shape=jax.ShapeDtypeStruct((M, N), x.dtype),
        grid_spec=pltpu.PrefetchScalarGridSpec(
            num_scalar_prefetch=0,
            grid=grid,
            in_specs=[
                pl.BlockSpec((tm, tk), lambda i, j, k: (i, k)),   # activations
                pl.BlockSpec((tk, tn), lambda i, j, k: (k, j)),   # weights
                pl.BlockSpec((1, tn), lambda i, j, k: (0, j)),    # fused bias
            ],
            out_specs=pl.BlockSpec((tm, tn), lambda i, j, k: (i, j)),
            scratch_shapes=[pltpu.VMEM((tm, tn), jnp.float32)],
        ),
        compiler_params=pltpu.CompilerParams(
            dimension_semantics=("parallel", "parallel", "arbitrary"),
            vmem_limit_bytes=vmem_limit,
        ),
    )(x, w, b2)


# ---------------------------------------------------------------------------
# Fused chain of small layers: all weights resident in VMEM, single grid step.
# ---------------------------------------------------------------------------
def fused_mlp_chain(x, layers, *, apply_leaky_flags, slope=0.01):
    M = x.shape[0]
    n = len(layers)
    n_out = layers[-1][0].shape[1]

    def kernel(x_ref, *refs):
        o_ref = refs[-1]
        h = x_ref[...].astype(jnp.float32)
        for i in range(n):
            w_ref, b_ref = refs[2 * i], refs[2 * i + 1]
            h = jnp.dot(h, w_ref[...], preferred_element_type=jnp.float32) + b_ref[...]
            if apply_leaky_flags[i]:
                h = jnp.where(h > 0, h, slope * h)
        o_ref[...] = h.astype(o_ref.dtype)

    args = [x]
    in_specs = [pl.BlockSpec(x.shape, lambda i: (0, 0))]
    for w, b in layers:
        args.append(w)
        args.append(b.reshape(1, -1))
        in_specs.append(pl.BlockSpec(w.shape, lambda i: (0, 0)))
        in_specs.append(pl.BlockSpec((1, b.shape[0]), lambda i: (0, 0)))

    return pl.pallas_call(
        kernel,
        out_shape=jax.ShapeDtypeStruct((M, n_out), x.dtype),
        grid=(1,),
        in_specs=in_specs,
        out_specs=pl.BlockSpec((M, n_out), lambda i: (0, 0)),
        compiler_params=pltpu.CompilerParams(dimension_semantics=("arbitrary",)),
    )(*args)


# ---------------------------------------------------------------------------
# Decoder wrapper
# ---------------------------------------------------------------------------
def fold_batchnorm(w_t, b, gamma, beta, mean, var, eps=1e-5):
    """Fold eval-mode BatchNorm1d into the preceding Linear (w_t is (in, out))."""
    s = gamma / jnp.sqrt(var + eps)
    return w_t * s[None, :], (b - mean) * s + beta


def decoder_forward(x, layers, *, slope=0.01):
    """layers: list of (w (K,N), b (N,)) with BN folded; last layer has no activation."""
    n = len(layers)
    leaky = [i < n - 1 for i in range(n)]
    vmem_limit = _vmem_limit_bytes()

    # Small front layers -> one VMEM-resident fused chain; big layers -> tiled streaming.
    PER_LAYER_LIMIT = 4 << 20    # max per-layer weight bytes kept resident
    CHAIN_LIMIT = 8 << 20        # max cumulative resident weight bytes
    split, total = 0, 0
    for w, _ in layers:
        wb = int(w.size) * w.dtype.itemsize
        if wb > PER_LAYER_LIMIT or total + wb > CHAIN_LIMIT:
            break
        total += wb
        split += 1

    h = x
    if split:
        h = fused_mlp_chain(h, layers[:split],
                            apply_leaky_flags=leaky[:split], slope=slope)
    for i in range(split, n):
        w, b = layers[i]
        h = fused_linear(h, w, b, apply_leaky=leaky[i], slope=slope,
                         vmem_limit=vmem_limit)
    return h


if __name__ == "__main__":
    B, z_dim = 16, 32
    dims = [z_dim, 128, 256, 512, 1024, 1024 * 3, 1024 * 3]
    slope = 0.01      # nn.LeakyReLU default
    eps = 1e-5        # nn.BatchNorm1d default

    key = jax.random.PRNGKey(0)
    key, kx = jax.random.split(key)
    x = jax.random.normal(kx, (B, z_dim), dtype=jnp.float32)

    layers = []
    for li in range(6):
        din, dout = dims[li], dims[li + 1]
        key, kw, kb, kg, kbe, km, kv = jax.random.split(key, 7)
        # nn.Linear weight (out, in) stored pre-transposed as (in, out)
        w_t = jax.random.normal(kw, (din, dout), dtype=jnp.float32) / jnp.sqrt(din)
        b = 0.1 * jax.random.normal(kb, (dout,), dtype=jnp.float32)
        if li < 5:  # LinearMLP layers carry BatchNorm1d (eval mode, folded)
            gamma = 1.0 + 0.1 * jax.random.normal(kg, (dout,), dtype=jnp.float32)
            beta = 0.1 * jax.random.normal(kbe, (dout,), dtype=jnp.float32)
            mean = 0.1 * jax.random.normal(km, (dout,), dtype=jnp.float32)
            var = 1.0 + 0.1 * jax.random.uniform(kv, (dout,), dtype=jnp.float32)
            w_t, b = fold_batchnorm(w_t, b, gamma, beta, mean, var, eps)
        layers.append((w_t, b))

    out = decoder_forward(x, layers)
    out = jax.block_until_ready(out)

    # Pure-JAX reference (same folded parameters)
    h = x
    for i, (w, b) in enumerate(layers):
        h = h @ w + b
        if i < 5:
            h = jnp.where(h > 0, h, slope * h)
    ref = h

    assert out.shape == (B, 1024 * 3)
    assert jnp.allclose(out, ref, atol=1e-2, rtol=1e-2), float(
        jnp.max(jnp.abs(out - ref))
    )
    print("KERNEL_OK")
</pallas_src>

<mosaic_0001>
module attributes {stable_mosaic.version = 11 : i64} {
  func.func @kernel(%arg0: i32, %arg1: memref<16x32xf32, #tpu.memory_space<vmem>>, %arg2: memref<32x128xf32, #tpu.memory_space<vmem>>, %arg3: memref<1x128xf32, #tpu.memory_space<vmem>>, %arg4: memref<128x256xf32, #tpu.memory_space<vmem>>, %arg5: memref<1x256xf32, #tpu.memory_space<vmem>>, %arg6: memref<256x512xf32, #tpu.memory_space<vmem>>, %arg7: memref<1x512xf32, #tpu.memory_space<vmem>>, %arg8: memref<512x1024xf32, #tpu.memory_space<vmem>>, %arg9: memref<1x1024xf32, #tpu.memory_space<vmem>>, %arg10: memref<16x1024xf32, #tpu.memory_space<vmem>>) attributes {dimension_semantics = [#tpu.dimension_semantics<arbitrary>], iteration_bounds = array<i64: 1>, scalar_prefetch = 0 : i64, scratch_operands = 0 : i64, tpu.core_type = #tpu.core_type<tc>, window_params = [{pipeline_mode = #tpu.pipeline_mode<synchronous>, transform_indices = @transform_0, window_bounds = array<i64: 16, 32>}, {pipeline_mode = #tpu.pipeline_mode<synchronous>, transform_indices = @transform_1, window_bounds = array<i64: 32, 128>}, {pipeline_mode = #tpu.pipeline_mode<synchronous>, transform_indices = @transform_2, window_bounds = array<i64: 1, 128>}, {pipeline_mode = #tpu.pipeline_mode<synchronous>, transform_indices = @transform_3, window_bounds = array<i64: 128, 256>}, {pipeline_mode = #tpu.pipeline_mode<synchronous>, transform_indices = @transform_4, window_bounds = array<i64: 1, 256>}, {pipeline_mode = #tpu.pipeline_mode<synchronous>, transform_indices = @transform_5, window_bounds = array<i64: 256, 512>}, {pipeline_mode = #tpu.pipeline_mode<synchronous>, transform_indices = @transform_6, window_bounds = array<i64: 1, 512>}, {pipeline_mode = #tpu.pipeline_mode<synchronous>, transform_indices = @transform_7, window_bounds = array<i64: 512, 1024>}, {pipeline_mode = #tpu.pipeline_mode<synchronous>, transform_indices = @transform_8, window_bounds = array<i64: 1, 1024>}, {pipeline_mode = #tpu.pipeline_mode<synchronous>, transform_indices = @transform_9, window_bounds = array<i64: 16, 1024>}]} {
    %c0 = arith.constant 0 : index
    %c0_0 = arith.constant 0 : index
    %0 = vector.load %arg1[%c0, %c0_0] : memref<16x32xf32, #tpu.memory_space<vmem>>, vector<16x32xf32>
    %c0_1 = arith.constant 0 : index
    %c0_2 = arith.constant 0 : index
    %1 = vector.load %arg2[%c0_1, %c0_2] : memref<32x128xf32, #tpu.memory_space<vmem>>, vector<32x128xf32>
    %cst = arith.constant dense<0.000000e+00> : vector<16x128xf32>
    %2 = tpu.matmul %0, %1, %cst {dimension_numbers = #tpu.dot_dimension_numbers<[1], [0], [0], [1], [0, 0, 1, 1], [], []>} : vector<16x32xf32>, vector<32x128xf32>, vector<16x128xf32> -> vector<16x128xf32>
    %c0_3 = arith.constant 0 : index
    %c0_4 = arith.constant 0 : index
    %3 = vector.load %arg3[%c0_3, %c0_4] : memref<1x128xf32, #tpu.memory_space<vmem>>, vector<1x128xf32>
    %4 = vector.broadcast %3 : vector<1x128xf32> to vector<16x128xf32>
    %5 = arith.addf %2, %4 : vector<16x128xf32>
    %cst_5 = arith.constant 0.000000e+00 : f32
    %6 = vector.broadcast %cst_5 : f32 to vector<16x128xf32>
    %7 = arith.cmpf ogt, %5, %6 : vector<16x128xf32>
    %cst_6 = arith.constant 0.00999999977 : f32
    %8 = vector.broadcast %cst_6 : f32 to vector<16x128xf32>
    %9 = arith.mulf %8, %5 : vector<16x128xf32>
    %10 = arith.select %7, %5, %9 : vector<16x128xi1>, vector<16x128xf32>
    %c0_7 = arith.constant 0 : index
    %c0_8 = arith.constant 0 : index
    %11 = vector.load %arg4[%c0_7, %c0_8] : memref<128x256xf32, #tpu.memory_space<vmem>>, vector<128x256xf32>
    %cst_9 = arith.constant dense<0.000000e+00> : vector<16x256xf32>
    %12 = tpu.matmul %10, %11, %cst_9 {dimension_numbers = #tpu.dot_dimension_numbers<[1], [0], [0], [1], [0, 0, 1, 1], [], []>} : vector<16x128xf32>, vector<128x256xf32>, vector<16x256xf32> -> vector<16x256xf32>
    %c0_10 = arith.constant 0 : index
    %c0_11 = arith.constant 0 : index
    %13 = vector.load %arg5[%c0_10, %c0_11] : memref<1x256xf32, #tpu.memory_space<vmem>>, vector<1x256xf32>
    %14 = vector.broadcast %13 : vector<1x256xf32> to vector<16x256xf32>
    %15 = arith.addf %12, %14 : vector<16x256xf32>
    %cst_12 = arith.constant 0.000000e+00 : f32
    %16 = vector.broadcast %cst_12 : f32 to vector<16x256xf32>
    %17 = arith.cmpf ogt, %15, %16 : vector<16x256xf32>
    %cst_13 = arith.constant 0.00999999977 : f32
    %18 = vector.broadcast %cst_13 : f32 to vector<16x256xf32>
    %19 = arith.mulf %18, %15 : vector<16x256xf32>
    %20 = arith.select %17, %15, %19 : vector<16x256xi1>, vector<16x256xf32>
    %c0_14 = arith.constant 0 : index
    %c0_15 = arith.constant 0 : index
    %21 = vector.load %arg6[%c0_14, %c0_15] : memref<256x512xf32, #tpu.memory_space<vmem>>, vector<256x512xf32>
    %cst_16 = arith.constant dense<0.000000e+00> : vector<16x512xf32>
    %22 = tpu.matmul %20, %21, %cst_16 {dimension_numbers = #tpu.dot_dimension_numbers<[1], [0], [0], [1], [0, 0, 1, 1], [], []>} : vector<16x256xf32>, vector<256x512xf32>, vector<16x512xf32> -> vector<16x512xf32>
    %c0_17 = arith.constant 0 : index
    %c0_18 = arith.constant 0 : index
    %23 = vector.load %arg7[%c0_17, %c0_18] : memref<1x512xf32, #tpu.memory_space<vmem>>, vector<1x512xf32>
    %24 = vector.broadcast %23 : vector<1x512xf32> to vector<16x512xf32>
    %25 = arith.addf %22, %24 : vector<16x512xf32>
    %cst_19 = arith.constant 0.000000e+00 : f32
    %26 = vector.broadcast %cst_19 : f32 to vector<16x512xf32>
    %27 = arith.cmpf ogt, %25, %26 : vector<16x512xf32>
    %cst_20 = arith.constant 0.00999999977 : f32
    %28 = vector.broadcast %cst_20 : f32 to vector<16x512xf32>
    %29 = arith.mulf %28, %25 : vector<16x512xf32>
    %30 = arith.select %27, %25, %29 : vector<16x512xi1>, vector<16x512xf32>
    %c0_21 = arith.constant 0 : index
    %c0_22 = arith.constant 0 : index
    %31 = vector.load %arg8[%c0_21, %c0_22] : memref<512x1024xf32, #tpu.memory_space<vmem>>, vector<512x1024xf32>
    %cst_23 = arith.constant dense<0.000000e+00> : vector<16x1024xf32>
    %32 = tpu.matmul %30, %31, %cst_23 {dimension_numbers = #tpu.dot_dimension_numbers<[1], [0], [0], [1], [0, 0, 1, 1], [], []>} : vector<16x512xf32>, vector<512x1024xf32>, vector<16x1024xf32> -> vector<16x1024xf32>
    %c0_24 = arith.constant 0 : index
    %c0_25 = arith.constant 0 : index
    %33 = vector.load %arg9[%c0_24, %c0_25] : memref<1x1024xf32, #tpu.memory_space<vmem>>, vector<1x1024xf32>
    %34 = vector.broadcast %33 : vector<1x1024xf32> to vector<16x1024xf32>
    %35 = arith.addf %32, %34 : vector<16x1024xf32>
    %cst_26 = arith.constant 0.000000e+00 : f32
    %36 = vector.broadcast %cst_26 : f32 to vector<16x1024xf32>
    %37 = arith.cmpf ogt, %35, %36 : vector<16x1024xf32>
    %cst_27 = arith.constant 0.00999999977 : f32
    %38 = vector.broadcast %cst_27 : f32 to vector<16x1024xf32>
    %39 = arith.mulf %38, %35 : vector<16x1024xf32>
    %40 = arith.select %37, %35, %39 : vector<16x1024xi1>, vector<16x1024xf32>
    %c0_28 = arith.constant 0 : index
    %c0_29 = arith.constant 0 : index
    %41 = vector.load %arg10[%c0_28, %c0_29] : memref<16x1024xf32, #tpu.memory_space<vmem>>, vector<16x1024xf32>
    tpu.vector_store %arg10[%c0_28, %c0_29], %40 {strides = array<i32>} : memref<16x1024xf32, #tpu.memory_space<vmem>>, vector<16x1024xf32>,
    return
  }
  func.func @transform_0(%arg0: i32) -> (i32, i32) {
    %c0_i32 = arith.constant 0 : i32
    %c0_i32_0 = arith.constant 0 : i32
    %c0_i32_1 = arith.constant 0 : i32
    return %c0_i32, %c0_i32_0 : i32, i32
  }
  func.func @transform_1(%arg0: i32) -> (i32, i32) {
    %c0_i32 = arith.constant 0 : i32
    %c0_i32_0 = arith.constant 0 : i32
    %c0_i32_1 = arith.constant 0 : i32
    return %c0_i32, %c0_i32_0 : i32, i32
  }
  func.func @transform_2(%arg0: i32) -> (i32, i32) {
    %c0_i32 = arith.constant 0 : i32
    %c0_i32_0 = arith.constant 0 : i32
    %c0_i32_1 = arith.constant 0 : i32
    return %c0_i32, %c0_i32_0 : i32, i32
  }
  func.func @transform_3(%arg0: i32) -> (i32, i32) {
    %c0_i32 = arith.constant 0 : i32
    %c0_i32_0 = arith.constant 0 : i32
    %c0_i32_1 = arith.constant 0 : i32
    return %c0_i32, %c0_i32_0 : i32, i32
  }
  func.func @transform_4(%arg0: i32) -> (i32, i32) {
    %c0_i32 = arith.constant 0 : i32
    %c0_i32_0 = arith.constant 0 : i32
    %c0_i32_1 = arith.constant 0 : i32
    return %c0_i32, %c0_i32_0 : i32, i32
  }
  func.func @transform_5(%arg0: i32) -> (i32, i32) {
    %c0_i32 = arith.constant 0 : i32
    %c0_i32_0 = arith.constant 0 : i32
    %c0_i32_1 = arith.constant 0 : i32
    return %c0_i32, %c0_i32_0 : i32, i32
  }
  func.func @transform_6(%arg0: i32) -> (i32, i32) {
    %c0_i32 = arith.constant 0 : i32
    %c0_i32_0 = arith.constant 0 : i32
    %c0_i32_1 = arith.constant 0 : i32
    return %c0_i32, %c0_i32_0 : i32, i32
  }
  func.func @transform_7(%arg0: i32) -> (i32, i32) {
    %c0_i32 = arith.constant 0 : i32
    %c0_i32_0 = arith.constant 0 : i32
    %c0_i32_1 = arith.constant 0 : i32
    return %c0_i32, %c0_i32_0 : i32, i32
  }
  func.func @transform_8(%arg0: i32) -> (i32, i32) {
    %c0_i32 = arith.constant 0 : i32
    %c0_i32_0 = arith.constant 0 : i32
    %c0_i32_1 = arith.constant 0 : i32
    return %c0_i32, %c0_i32_0 : i32, i32
  }
  func.func @transform_9(%arg0: i32) -> (i32, i32) {
    %c0_i32 = arith.constant 0 : i32
    %c0_i32_0 = arith.constant 0 : i32
    %c0_i32_1 = arith.constant 0 : i32
    return %c0_i32, %c0_i32_0 : i32, i32
  }
}

</mosaic_0001>

<llo_original>
// kernel: tpu_custom_call.1
$region0: #{tpu_custom_call.1}
  #allocation0 [shape = 'u32[]', space=smem, size = 0x4, offset = 0x4, fixed_abs, tag = 'smem constant byte address 0x4 - core index']
  #allocation1 [shape = 'u32[72,128]{1,0:T(1,128)}', space=vmem, size = 0x9000, scoped, tag = 'internal scratch']
  %s0 = inlined_call_operand.hbm [shape: f32[16,32], index: 0, kind: input, shape index: {}]
  %s1 = inlined_call_operand.hbm [shape: f32[32,128], index: 1, kind: input, shape index: {}]
  %s2 = inlined_call_operand.hbm [shape: f32[1,128], index: 2, kind: input, shape index: {}]
  %s3 = inlined_call_operand.hbm [shape: f32[128,256], index: 3, kind: input, shape index: {}]
  %s4 = inlined_call_operand.hbm [shape: f32[1,256], index: 4, kind: input, shape index: {}]
  %s5 = inlined_call_operand.hbm [shape: f32[256,512], index: 5, kind: input, shape index: {}]
  %s6 = inlined_call_operand.hbm [shape: f32[1,512], index: 6, kind: input, shape index: {}]
  %s7 = inlined_call_operand.hbm [shape: f32[512,1024], index: 7, kind: input, shape index: {}]
  %s8 = inlined_call_operand.hbm [shape: f32[1,1024], index: 8, kind: input, shape index: {}]
  %s9 = inlined_call_operand.hbm [shape: f32[16,1024], index: 9, kind: output, shape index: {}]
  %s10 = sld [smem:[#allocation0]]
  $region82: #{tpu_custom_call.1} parent=0
    _
  %s12 = ssub.s32 1, %s10
  %s13 = scalar_select 0, %s12, %s10
  $region1: #{tpu_custom_call.1} parent=0
    #allocation2 [shape = 'u8[8192]{0}', space=vmem, size = 0x2000, scoped, tag = 'input window, operand 0, single buffered']
    #allocation3 [shape = 's32[1]{0}', space=sflag, size = 0x4, scoped, tag = 'scoped memory for tpu_custom_call.1']
    #allocation4 [shape = 's32[1]{0}', space=sflag, size = 0x4, scoped, tag = 'scoped memory for tpu_custom_call.1']
    #allocation5 [shape = 'u8[16384]{0}', space=vmem, size = 0x4000, scoped, tag = 'input window, operand 1, single buffered']
    #allocation6 [shape = 's32[1]{0}', space=sflag, size = 0x4, scoped, tag = 'scoped memory for tpu_custom_call.1']
    #allocation7 [shape = 'u8[512]{0}', space=vmem, size = 0x400, scoped, tag = 'input window, operand 2, single buffered']
    #allocation8 [shape = 'u8[131072]{0}', space=vmem, size = 0x20000, scoped, tag = 'input window, operand 3, single buffered']
    #allocation9 [shape = 's32[1]{0}', space=sflag, size = 0x4, scoped, tag = 'scoped memory for tpu_custom_call.1']
    #allocation10 [shape = 'u8[1024]{0}', space=vmem, size = 0x400, scoped, tag = 'input window, operand 4, single buffered']
    #allocation11 [shape = 'u8[524288]{0}', space=vmem, size = 0x80000, scoped, tag = 'input window, operand 5, single buffered']
    #allocation12 [shape = 's32[1]{0}', space=sflag, size = 0x4, scoped, tag = 'scoped memory for tpu_custom_call.1']
    #allocation13 [shape = 'u8[2048]{0}', space=vmem, size = 0x800, scoped, tag = 'input window, operand 6, single buffered']
    #allocation14 [shape = 'u8[2097152]{0}', space=vmem, size = 0x200000, scoped, tag = 'input window, operand 7, single buffered']
    #allocation15 [shape = 's32[1]{0}', space=sflag, size = 0x4, scoped, tag = 'scoped memory for tpu_custom_call.1']
    #allocation16 [shape = 'u8[4096]{0}', space=vmem, size = 0x1000, scoped, tag = 'input window, operand 8, single buffered']
    #allocation17 [shape = 'u8[65536]{0}', space=vmem, size = 0x10000, scoped, tag = 'output window, operand 0, single buffered']
    %14 = vsyncpa [#allocation3], 0
    %15 = vsyncpa [#allocation6], 0
    %16 = vsyncpa [#allocation9], 0
    %17 = vsyncpa [#allocation12], 0
    %18 = vsyncpa [#allocation15], 0
    %19 = vsyncpa [#allocation4], 0
    // Predicated region
    $region2: #{tpu_custom_call.1} parent=1 // pred_check
      _
    $region3: #{tpu_custom_call.1} parent=1 // pred_check_branch
      %21 = sbr.rel (0) target = $region5
    $region4: #{tpu_custom_call.1} parent=1 // pred_region
      %23 = vsyncadd [#allocation3], 0
      %s24 = sshll.u32 %s0, 4
      %s25 = int_to_ptr.hbm [resolvable:$true] %s24
      %s26 = sshll.u32 [#allocation2], 4
      %s27 = int_to_ptr.vmem [resolvable:$true] %s26
      %32 = dma.hbm_to_vmem [thread:$0]  %s25, 256, %s27, [#allocation3], 128, 128, 8
    $region5: #{tpu_custom_call.1} parent=1 // pred_fallthru
      _
    // Predicated region
    $region6: #{tpu_custom_call.1} parent=1 // pred_check
      _
    $region7: #{tpu_custom_call.1} parent=1 // pred_check_branch
      %34 = sbr.rel (0) target = $region9
    $region8: #{tpu_custom_call.1} parent=1 // pred_region
      %36 = vsyncadd [#allocation6], 0
      %s37 = sshll.u32 %s1, 4
      %s38 = int_to_ptr.hbm [resolvable:$true] %s37
      %s39 = sshll.u32 [#allocation5], 4
      %s40 = int_to_ptr.vmem [resolvable:$true] %s39
      %45 = dma.hbm_to_vmem [thread:$0]  %s38, 512, %s40, [#allocation6], 128, 128, 8
    $region9: #{tpu_custom_call.1} parent=1 // pred_fallthru
      _
    // Predicated region
    $region10: #{tpu_custom_call.1} parent=1 // pred_check
      _
    $region11: #{tpu_custom_call.1} parent=1 // pred_check_branch
      %47 = sbr.rel (0) target = $region13
    $region12: #{tpu_custom_call.1} parent=1 // pred_region
      %49 = vsyncadd [#allocation6], 0
      %s51 = sshll.u32 %s2, 4
      %s52 = int_to_ptr.hbm [resolvable:$true] %s51
      %s53 = sshll.u32 [#allocation7], 4
      %s54 = int_to_ptr.vmem [resolvable:$true] %s53
      %56 = dma.hbm_to_vmem [thread:$0]  %s52, 16, %s54, [#allocation6]
    $region13: #{tpu_custom_call.1} parent=1 // pred_fallthru
      _
    // Predicated region
    $region14: #{tpu_custom_call.1} parent=1 // pred_check
      _
    $region15: #{tpu_custom_call.1} parent=1 // pred_check_branch
      %58 = sbr.rel (0) target = $region17
    $region16: #{tpu_custom_call.1} parent=1 // pred_region
      %60 = vsyncadd [#allocation9], 0
      %s61 = sshll.u32 %s3, 4
      %s62 = int_to_ptr.hbm [resolvable:$true] %s61
      %s63 = sshll.u32 [#allocation8], 4
      %s64 = int_to_ptr.vmem [resolvable:$true] %s63
      %69 = dma.hbm_to_vmem [thread:$0]  %s62, 4096, %s64, [#allocation9], 256, 256, 16
    $region17: #{tpu_custom_call.1} parent=1 // pred_fallthru
      _
    // Predicated region
    $region18: #{tpu_custom_call.1} parent=1 // pred_check
      _
    $region19: #{tpu_custom_call.1} parent=1 // pred_check_branch
      %71 = sbr.rel (0) target = $region21
    $region20: #{tpu_custom_call.1} parent=1 // pred_region
      %73 = vsyncadd [#allocation9], 0
      %s75 = sshll.u32 %s4, 4
      %s76 = int_to_ptr.hbm [resolvable:$true] %s75
      %s77 = sshll.u32 [#allocation10], 4
      %s78 = int_to_ptr.vmem [resolvable:$true] %s77
      %80 = dma.hbm_to_vmem [thread:$0]  %s76, 32, %s78, [#allocation9]
    $region21: #{tpu_custom_call.1} parent=1 // pred_fallthru
      _
    // Predicated region
    $region22: #{tpu_custom_call.1} parent=1 // pred_check
      _
    $region23: #{tpu_custom_call.1} parent=1 // pred_check_branch
      %82 = sbr.rel (0) target = $region25
    $region24: #{tpu_custom_call.1} parent=1 // pred_region
      %84 = vsyncadd [#allocation12], 0
      %s85 = sshll.u32 %s5, 4
      %s86 = int_to_ptr.hbm [resolvable:$true] %s85
      %s87 = sshll.u32 [#allocation11], 4
      %s88 = int_to_ptr.vmem [resolvable:$true] %s87
      %93 = dma.hbm_to_vmem [thread:$0]  %s86, 16384, %s88, [#allocation12], 512, 512, 32
    $region25: #{tpu_custom_call.1} parent=1 // pred_fallthru
      _
    // Predicated region
    $region26: #{tpu_custom_call.1} parent=1 // pred_check
      _
    $region27: #{tpu_custom_call.1} parent=1 // pred_check_branch
      %95 = sbr.rel (0) target = $region29
    $region28: #{tpu_custom_call.1} parent=1 // pred_region
      %97 = vsyncadd [#allocation12], 0
      %s99 = sshll.u32 %s6, 4
      %s100 = int_to_ptr.hbm [resolvable:$true] %s99
      %s101 = sshll.u32 [#allocation13], 4
      %s102 = int_to_ptr.vmem [resolvable:$true] %s101
      %104 = dma.hbm_to_vmem [thread:$0]  %s100, 64, %s102, [#allocation12]
    $region29: #{tpu_custom_call.1} parent=1 // pred_fallthru
      _
    // Predicated region
    $region30: #{tpu_custom_call.1} parent=1 // pred_check
      _
    $region31: #{tpu_custom_call.1} parent=1 // pred_check_branch
      %106 = sbr.rel (0) target = $region33
    $region32: #{tpu_custom_call.1} parent=1 // pred_region
      %108 = vsyncadd [#allocation15], 0
      %s109 = sshll.u32 %s7, 4
      %s110 = int_to_ptr.hbm [resolvable:$true] %s109
      %s111 = sshll.u32 [#allocation14], 4
      %s112 = int_to_ptr.vmem [resolvable:$true] %s111
      %117 = dma.hbm_to_vmem [thread:$0]  %s110, 65536, %s112, [#allocation15], 1024, 1024, 64
    $region33: #{tpu_custom_call.1} parent=1 // pred_fallthru
      _
    // Predicated region
    $region34: #{tpu_custom_call.1} parent=1 // pred_check
      _
    $region35: #{tpu_custom_call.1} parent=1 // pred_check_branch
      %119 = sbr.rel (0) target = $region37
    $region36: #{tpu_custom_call.1} parent=1 // pred_region
      %121 = vsyncadd [#allocation15], 0
      %s123 = sshll.u32 %s8, 4
      %s124 = int_to_ptr.hbm [resolvable:$true] %s123
      %s125 = sshll.u32 [#allocation16], 4
      %s126 = int_to_ptr.vmem [resolvable:$true] %s125
      %128 = dma.hbm_to_vmem [thread:$0]  %s124, 128, %s126, [#allocation15]
    $region37: #{tpu_custom_call.1} parent=1 // pred_fallthru
      _
    // Predicated region
    $region38: #{tpu_custom_call.1} parent=1 // pred_check
      _
    $region39: #{tpu_custom_call.1} parent=1 // pred_check_branch
      %130 = sbr.rel (0) target = $region41
    $region40: #{tpu_custom_call.1} parent=1 // pred_region
      %132 = dma.done [#allocation3], 256
    $region41: #{tpu_custom_call.1} parent=1 // pred_fallthru
      _
    // Predicated region
    $region42: #{tpu_custom_call.1} parent=1 // pred_check
      _
    $region43: #{tpu_custom_call.1} parent=1 // pred_check_branch
      %134 = sbr.rel (0) target = $region45
    $region44: #{tpu_custom_call.1} parent=1 // pred_region
      %136 = dma.done [#allocation6], 512
    $region45: #{tpu_custom_call.1} parent=1 // pred_fallthru
      _
    // Predicated region
    $region46: #{tpu_custom_call.1} parent=1 // pred_check
      _
    $region47: #{tpu_custom_call.1} parent=1 // pred_check_branch
      %138 = sbr.rel (0) target = $region49
    $region48: #{tpu_custom_call.1} parent=1 // pred_region
      %140 = dma.done [#allocation6], 16
    $region49: #{tpu_custom_call.1} parent=1 // pred_fallthru
      _
    // Predicated region
    $region50: #{tpu_custom_call.1} parent=1 // pred_check
      _
    $region51: #{tpu_custom_call.1} parent=1 // pred_check_branch
      %142 = sbr.rel (0) target = $region53
    $region52: #{tpu_custom_call.1} parent=1 // pred_region
      %144 = dma.done [#allocation9], 4096
    $region53: #{tpu_custom_call.1} parent=1 // pred_fallthru
      _
    // Predicated region
    $region54: #{tpu_custom_call.1} parent=1 // pred_check
      _
    $region55: #{tpu_custom_call.1} parent=1 // pred_check_branch
      %146 = sbr.rel (0) target = $region57
    $region56: #{tpu_custom_call.1} parent=1 // pred_region
      %148 = dma.done [#allocation9], 32
    $region57: #{tpu_custom_call.1} parent=1 // pred_fallthru
      _
    // Predicated region
    $region58: #{tpu_custom_call.1} parent=1 // pred_check
      _
    $region59: #{tpu_custom_call.1} parent=1 // pred_check_branch
      %150 = sbr.rel (0) target = $region61
    $region60: #{tpu_custom_call.1} parent=1 // pred_region
      %152 = dma.done [#allocation12], 16384
    $region61: #{tpu_custom_call.1} parent=1 // pred_fallthru
      _
    // Predicated region
    $region62: #{tpu_custom_call.1} parent=1 // pred_check
      _
    $region63: #{tpu_custom_call.1} parent=1 // pred_check_branch
      %154 = sbr.rel (0) target = $region65
    $region64: #{tpu_custom_call.1} parent=1 // pred_region
      %156 = dma.done [#allocation12], 64
    $region65: #{tpu_custom_call.1} parent=1 // pred_fallthru
      _
    // Predicated region
    $region66: #{tpu_custom_call.1} parent=1 // pred_check
      _
    $region67: #{tpu_custom_call.1} parent=1 // pred_check_branch
      %158 = sbr.rel (0) target = $region69
    $region68: #{tpu_custom_call.1} parent=1 // pred_region
      %160 = dma.done [#allocation15], 65536
    $region69: #{tpu_custom_call.1} parent=1 // pred_fallthru
      _
    // Predicated region
    $region70: #{tpu_custom_call.1} parent=1 // pred_check
      _
    $region71: #{tpu_custom_call.1} parent=1 // pred_check_branch
      %162 = sbr.rel (0) target = $region73
    $region72: #{tpu_custom_call.1} parent=1 // pred_region
      %164 = dma.done [#allocation15], 128
    $region73: #{tpu_custom_call.1} parent=1 // pred_fallthru
      _
    %v165 = vld [vmem:[#allocation2] sm:$0xff]
    %v166 = vld [vmem:[#allocation2 + $0x8] sm:$0xff]
    %v167 = vld [vmem:[#allocation5] sm:$0xff]
    %v168 = vld [vmem:[#allocation5 + $0x8] sm:$0xff]
    %v169 = vld [vmem:[#allocation5 + $0x10] sm:$0xff]
    %v170 = vld [vmem:[#allocation5 + $0x18] sm:$0xff]
    %v171 = vld [vmem:[#allocation7] sm:$0x1]
    %v173 = vperm.slane %v171, 0
    %vm175 = vcmask 261120
    %v177 = vsel %vm175, %v165, 0
    %v180 = vsel %vm175, %v166, 0
    %182 = vmatpush.msra.mxu0 0.0
    %183 = vmatpush.msra.mxu0 0.0
    %184 = vmatpush.msra.mxu0 0.0
    %185 = vmatpush.msra.mxu0 0.0
    %186 = vmatpush.msra.mxu0 0.0
    %187 = vmatpush.msra.mxu0 0.0
    %188 = vmatpush.msra.mxu0 0.0
    %189 = vmatpush.msra.mxu0 0.0
    %190 = vmatpush.msra.mxu0 0.0
    %191 = vmatpush.msra.mxu0 0.0
    %192 = vmatpush.msra.mxu0 0.0
    %193 = vmatpush.msra.mxu0 0.0
    %194 = vmatpush.msra.mxu0 %v170
    %195 = vmatpush.msra.mxu0 %v169
    %196 = vmatpush.msra.mxu0 %v168
    %197 = vmatpush.msra.mxu0 %v167
    %198 = vmatmul.f32.gmra.mxu0 %v177
    %v199 = vpop.f32.mrf.mxu0
    %v200 = vadd.f32 %v173, %v199
    %201 = vmatmul.f32.gmra.mxu0 %v180
    %v202 = vpop.f32.mrf.mxu0
    %v203 = vadd.f32 %v173, %v202
    %204 = vdwg.mxu0
    %vm205 = vcmp.gt.f32.partialorder %v200, 0.0
    %vm206 = vcmp.gt.f32.partialorder %v203, 0.0
    %v207 = vmul.f32 %v200, 0.01
    %v208 = vmul.f32 %v203, 0.01
    %v209 = vsel %vm205, %v200, %v207
    %v210 = vsel %vm206, %v203, %v208
    %v211 = vld [vmem:[#allocation8] sm:$0xff]
    %v212 = vld [vmem:[#allocation8 + $0x8] sm:$0xff]
    %v213 = vld [vmem:[#allocation8 + $0x10] sm:$0xff]
    %v214 = vld [vmem:[#allocation8 + $0x18] sm:$0xff]
    %v215 = vld [vmem:[#allocation8 + $0x20] sm:$0xff]
    %v216 = vld [vmem:[#allocation8 + $0x28] sm:$0xff]
    %v217 = vld [vmem:[#allocation8 + $0x30] sm:$0xff]
    %v218 = vld [vmem:[#allocation8 + $0x38] sm:$0xff]
    %v219 = vld [vmem:[#allocation8 + $0x40] sm:$0xff]
    %v220 = vld [vmem:[#allocation8 + $0x48] sm:$0xff]
    %v221 = vld [vmem:[#allocation8 + $0x50] sm:$0xff]
    %v222 = vld [vmem:[#allocation8 + $0x58] sm:$0xff]
    %v223 = vld [vmem:[#allocation8 + $0x60] sm:$0xff]
    %v224 = vld [vmem:[#allocation8 + $0x68] sm:$0xff]
    %v225 = vld [vmem:[#allocation8 + $0x70] sm:$0xff]
    %v226 = vld [vmem:[#allocation8 + $0x78] sm:$0xff]
    %v227 = vld [vmem:[#allocation8 + $0x80] sm:$0xff]
    %v228 = vld [vmem:[#allocation8 + $0x88] sm:$0xff]
    %v229 = vld [vmem:[#allocation8 + $0x90] sm:$0xff]
    %v230 = vld [vmem:[#allocation8 + $0x98] sm:$0xff]
    %v231 = vld [vmem:[#allocation8 + $0xa0] sm:$0xff]
    %v232 = vld [vmem:[#allocation8 + $0xa8] sm:$0xff]
    %v233 = vld [vmem:[#allocation8 + $0xb0] sm:$0xff]
    %v234 = vld [vmem:[#allocation8 + $0xb8] sm:$0xff]
    %v235 = vld [vmem:[#allocation8 + $0xc0] sm:$0xff]
    %v236 = vld [vmem:[#allocation8 + $0xc8] sm:$0xff]
    %v237 = vld [vmem:[#allocation8 + $0xd0] sm:$0xff]
    %v238 = vld [vmem:[#allocation8 + $0xd8] sm:$0xff]
    %v239 = vld [vmem:[#allocation8 + $0xe0] sm:$0xff]
    %v240 = vld [vmem:[#allocation8 + $0xe8] sm:$0xff]
    %v241 = vld [vmem:[#allocation8 + $0xf0] sm:$0xff]
    %v242 = vld [vmem:[#allocation8 + $0xf8] sm:$0xff]
    %v243 = vld [vmem:[#allocation10] sm:$0x3]
    %v245 = vperm.slane %v243, 0
    %v246 = vperm.slane %v243, 1
    %249 = vmatpush.msra.mxu0 %v241
    %250 = vmatpush.msra.mxu0 %v239
    %251 = vmatpush.msra.mxu0 %v237
    %252 = vmatpush.msra.mxu0 %v235
    %253 = vmatpush.msra.mxu0 %v233
    %254 = vmatpush.msra.mxu0 %v231
    %255 = vmatpush.msra.mxu0 %v229
    %256 = vmatpush.msra.mxu0 %v227
    %257 = vmatpush.msra.mxu0 %v225
    %258 = vmatpush.msra.mxu0 %v223
    %259 = vmatpush.msra.mxu0 %v221
    %260 = vmatpush.msra.mxu0 %v219
    %261 = vmatpush.msra.mxu0 %v217
    %262 = vmatpush.msra.mxu0 %v215
    %263 = vmatpush.msra.mxu0 %v213
    %264 = vmatpush.msra.mxu0 %v211
    %265 = vmatmul.f32.gmra.mxu0 %v209
    %v266 = vpop.f32.mrf.mxu0
    %v267 = vadd.f32 %v245, %v266
    %268 = vmatmul.f32.gmra.mxu0 %v210
    %v269 = vpop.f32.mrf.mxu0
    %v270 = vadd.f32 %v245, %v269
    %271 = vdwg.mxu0
    %272 = vmatpush.msra.mxu0 %v242
    %273 = vmatpush.msra.mxu0 %v240
    %274 = vmatpush.msra.mxu0 %v238
    %275 = vmatpush.msra.mxu0 %v236
    %276 = vmatpush.msra.mxu0 %v234
    %277 = vmatpush.msra.mxu0 %v232
    %278 = vmatpush.msra.mxu0 %v230
    %279 = vmatpush.msra.mxu0 %v228
    %280 = vmatpush.msra.mxu0 %v226
    %281 = vmatpush.msra.mxu0 %v224
    %282 = vmatpush.msra.mxu0 %v222
    %283 = vmatpush.msra.mxu0 %v220
    %284 = vmatpush.msra.mxu0 %v218
    %285 = vmatpush.msra.mxu0 %v216
    %286 = vmatpush.msra.mxu0 %v214
    %287 = vmatpush.msra.mxu0 %v212
    %288 = vmatmul.f32.gmra.mxu0 %v209
    %v289 = vpop.f32.mrf.mxu0
    %v290 = vadd.f32 %v246, %v289
    %291 = vmatmul.f32.gmra.mxu0 %v210
    %v292 = vpop.f32.mrf.mxu0
    %v293 = vadd.f32 %v246, %v292
    %294 = vdwg.mxu0
    %vm295 = vcmp.gt.f32.partialorder %v267, 0.0
    %vm296 = vcmp.gt.f32.partialorder %v290, 0.0
    %vm297 = vcmp.gt.f32.partialorder %v270, 0.0
    %vm298 = vcmp.gt.f32.partialorder %v293, 0.0
    %v299 = vmul.f32 %v267, 0.01
    %v300 = vmul.f32 %v290, 0.01
    %v301 = vmul.f32 %v270, 0.01
    %v302 = vmul.f32 %v293, 0.01
    %v303 = vsel %vm295, %v267, %v299
    %v304 = vsel %vm296, %v290, %v300
    %v305 = vsel %vm297, %v270, %v301
    %v306 = vsel %vm298, %v293, %v302
    %v307 = vld [vmem:[#allocation11] sm:$0xff]
    %v308 = vld [vmem:[#allocation11 + $0x8] sm:$0xff]
    %v309 = vld [vmem:[#allocation11 + $0x10] sm:$0xff]
    %v310 = vld [vmem:[#allocation11 + $0x18] sm:$0xff]
    %v311 = vld [vmem:[#allocation11 + $0x20] sm:$0xff]
    %v312 = vld [vmem:[#allocation11 + $0x28] sm:$0xff]
    %v313 = vld [vmem:[#allocation11 + $0x30] sm:$0xff]
    %v314 = vld [vmem:[#allocation11 + $0x38] sm:$0xff]
    %v315 = vld [vmem:[#allocation11 + $0x40] sm:$0xff]
    %v316 = vld [vmem:[#allocation11 + $0x48] sm:$0xff]
    %v317 = vld [vmem:[#allocation11 + $0x50] sm:$0xff]
    %v318 = vld [vmem:[#allocation11 + $0x58] sm:$0xff]
    %v319 = vld [vmem:[#allocation11 + $0x60] sm:$0xff]
    %v320 = vld [vmem:[#allocation11 + $0x68] sm:$0xff]
    %v321 = vld [vmem:[#allocation11 + $0x70] sm:$0xff]
    %v322 = vld [vmem:[#allocation11 + $0x78] sm:$0xff]
    %v323 = vld [vmem:[#allocation11 + $0x80] sm:$0xff]
    %v324 = vld [vmem:[#allocation11 + $0x88] sm:$0xff]
    %v325 = vld [vmem:[#allocation11 + $0x90] sm:$0xff]
    %v326 = vld [vmem:[#allocation11 + $0x98] sm:$0xff]
    %v327 = vld [vmem:[#allocation11 + $0xa0] sm:$0xff]
    %v328 = vld [vmem:[#allocation11 + $0xa8] sm:$0xff]
    %v329 = vld [vmem:[#allocation11 + $0xb0] sm:$0xff]
    %v330 = vld [vmem:[#allocation11 + $0xb8] sm:$0xff]
    %v331 = vld [vmem:[#allocation11 + $0xc0] sm:$0xff]
    %v332 = vld [vmem:[#allocation11 + $0xc8] sm:$0xff]
    %v333 = vld [vmem:[#allocation11 + $0xd0] sm:$0xff]
    %v334 = vld [vmem:[#allocation11 + $0xd8] sm:$0xff]
    %v335 = vld [vmem:[#allocation11 + $0xe0] sm:$0xff]
    %v336 = vld [vmem:[#allocation11 + $0xe8] sm:$0xff]
    %v337 = vld [vmem:[#allocation11 + $0xf0] sm:$0xff]
    %v338 = vld [vmem:[#allocation11 + $0xf8] sm:$0xff]
    %v339 = vld [vmem:[#allocation11 + $0x100] sm:$0xff]
    %v340 = vld [vmem:[#allocation11 + $0x108] sm:$0xff]
    %v341 = vld [vmem:[#allocation11 + $0x110] sm:$0xff]
    %v342 = vld [vmem:[#allocation11 + $0x118] sm:$0xff]
    %v343 = vld [vmem:[#allocation11 + $0x120] sm:$0xff]
    %v344 = vld [vmem:[#allocation11 + $0x128] sm:$0xff]
    %v345 = vld [vmem:[#allocation11 + $0x130] sm:$0xff]
    %v346 = vld [vmem:[#allocation11 + $0x138] sm:$0xff]
    %v347 = vld [vmem:[#allocation11 + $0x140] sm:$0xff]
    %v348 = vld [vmem:[#allocation11 + $0x148] sm:$0xff]
    %v349 = vld [vmem:[#allocation11 + $0x150] sm:$0xff]
    %v350 = vld [vmem:[#allocation11 + $0x158] sm:$0xff]
    %v351 = vld [vmem:[#allocation11 + $0x160] sm:$0xff]
    %v352 = vld [vmem:[#allocation11 + $0x168] sm:$0xff]
    %v353 = vld [vmem:[#allocation11 + $0x170] sm:$0xff]
    %v354 = vld [vmem:[#allocation11 + $0x178] sm:$0xff]
    %v355 = vld [vmem:[#allocation11 + $0x180] sm:$0xff]
    %v356 = vld [vmem:[#allocation11 + $0x188] sm:$0xff]
    %v357 = vld [vmem:[#allocation11 + $0x190] sm:$0xff]
    %v358 = vld [vmem:[#allocation11 + $0x198] sm:$0xff]
    %v359 = vld [vmem:[#allocation11 + $0x1a0] sm:$0xff]
    %v360 = vld [vmem:[#allocation11 + $0x1a8] sm:$0xff]
    %v361 = vld [vmem:[#allocation11 + $0x1b0] sm:$0xff]
    %v362 = vld [vmem:[#allocation11 + $0x1b8] sm:$0xff]
    %v363 = vld [vmem:[#allocation11 + $0x1c0] sm:$0xff]
    %v364 = vld [vmem:[#allocation11 + $0x1c8] sm:$0xff]
    %v365 = vld [vmem:[#allocation11 + $0x1d0] sm:$0xff]
    %v366 = vld [vmem:[#allocation11 + $0x1d8] sm:$0xff]
    %v367 = vld [vmem:[#allocation11 + $0x1e0] sm:$0xff]
    %v368 = vld [vmem:[#allocation11 + $0x1e8] sm:$0xff]
    %v369 = vld [vmem:[#allocation11 + $0x1f0] sm:$0xff]
    %v370 = vld [vmem:[#allocation11 + $0x1f8] sm:$0xff]
    %v371 = vld [vmem:[#allocation11 + $0x200] sm:$0xff]
    %v372 = vld [vmem:[#allocation11 + $0x208] sm:$0xff]
    %v373 = vld [vmem:[#allocation11 + $0x210] sm:$0xff]
    %v374 = vld [vmem:[#allocation11 + $0x218] sm:$0xff]
    %v375 = vld [vmem:[#allocation11 + $0x220] sm:$0xff]
    %v376 = vld [vmem:[#allocation11 + $0x228] sm:$0xff]
    %v377 = vld [vmem:[#allocation11 + $0x230] sm:$0xff]
    %v378 = vld [vmem:[#allocation11 + $0x238] sm:$0xff]
    %v379 = vld [vmem:[#allocation11 + $0x240] sm:$0xff]
    %v380 = vld [vmem:[#allocation11 + $0x248] sm:$0xff]
    %v381 = vld [vmem:[#allocation11 + $0x250] sm:$0xff]
    %v382 = vld [vmem:[#allocation11 + $0x258] sm:$0xff]
    %v383 = vld [vmem:[#allocation11 + $0x260] sm:$0xff]
    %v384 = vld [vmem:[#allocation11 + $0x268] sm:$0xff]
    %v385 = vld [vmem:[#allocation11 + $0x270] sm:$0xff]
    %v386 = vld [vmem:[#allocation11 + $0x278] sm:$0xff]
    %v387 = vld [vmem:[#allocation11 + $0x280] sm:$0xff]
    %v388 = vld [vmem:[#allocation11 + $0x288] sm:$0xff]
    %v389 = vld [vmem:[#allocation11 + $0x290] sm:$0xff]
    %v390 = vld [vmem:[#allocation11 + $0x298] sm:$0xff]
    %v391 = vld [vmem:[#allocation11 + $0x2a0] sm:$0xff]
    %v392 = vld [vmem:[#allocation11 + $0x2a8] sm:$0xff]
    %v393 = vld [vmem:[#allocation11 + $0x2b0] sm:$0xff]
    %v394 = vld [vmem:[#allocation11 + $0x2b8] sm:$0xff]
    %v395 = vld [vmem:[#allocation11 + $0x2c0] sm:$0xff]
    %v396 = vld [vmem:[#allocation11 + $0x2c8] sm:$0xff]
    %v397 = vld [vmem:[#allocation11 + $0x2d0] sm:$0xff]
    %v398 = vld [vmem:[#allocation11 + $0x2d8] sm:$0xff]
    %v399 = vld [vmem:[#allocation11 + $0x2e0] sm:$0xff]
    %v400 = vld [vmem:[#allocation11 + $0x2e8] sm:$0xff]
    %v401 = vld [vmem:[#allocation11 + $0x2f0] sm:$0xff]
    %v402 = vld [vmem:[#allocation11 + $0x2f8] sm:$0xff]
    %v403 = vld [vmem:[#allocation11 + $0x300] sm:$0xff]
    %v404 = vld [vmem:[#allocation11 + $0x308] sm:$0xff]
    %v405 = vld [vmem:[#allocation11 + $0x310] sm:$0xff]
    %v406 = vld [vmem:[#allocation11 + $0x318] sm:$0xff]
    %v407 = vld [vmem:[#allocation11 + $0x320] sm:$0xff]
    %v408 = vld [vmem:[#allocation11 + $0x328] sm:$0xff]
    %v409 = vld [vmem:[#allocation11 + $0x330] sm:$0xff]
    %v410 = vld [vmem:[#allocation11 + $0x338] sm:$0xff]
    %v411 = vld [vmem:[#allocation11 + $0x340] sm:$0xff]
    %v412 = vld [vmem:[#allocation11 + $0x348] sm:$0xff]
    %v413 = vld [vmem:[#allocation11 + $0x350] sm:$0xff]
    %v414 = vld [vmem:[#allocation11 + $0x358] sm:$0xff]
    %v415 = vld [vmem:[#allocation11 + $0x360] sm:$0xff]
    %v416 = vld [vmem:[#allocation11 + $0x368] sm:$0xff]
    %v417 = vld [vmem:[#allocation11 + $0x370] sm:$0xff]
    %v418 = vld [vmem:[#allocation11 + $0x378] sm:$0xff]
    %v419 = vld [vmem:[#allocation11 + $0x380] sm:$0xff]
    %v420 = vld [vmem:[#allocation11 + $0x388] sm:$0xff]
    %v421 = vld [vmem:[#allocation11 + $0x390] sm:$0xff]
    %v422 = vld [vmem:[#allocation11 + $0x398] sm:$0xff]
    %v423 = vld [vmem:[#allocation11 + $0x3a0] sm:$0xff]
    %v424 = vld [vmem:[#allocation11 + $0x3a8] sm:$0xff]
    %v425 = vld [vmem:[#allocation11 + $0x3b0] sm:$0xff]
    %v426 = vld [vmem:[#allocation11 + $0x3b8] sm:$0xff]
    %v427 = vld [vmem:[#allocation11 + $0x3c0] sm:$0xff]
    %v428 = vld [vmem:[#allocation11 + $0x3c8] sm:$0xff]
    %v429 = vld [vmem:[#allocation11 + $0x3d0] sm:$0xff]
    %v430 = vld [vmem:[#allocation11 + $0x3d8] sm:$0xff]
    %v431 = vld [vmem:[#allocation11 + $0x3e0] sm:$0xff]
    %v432 = vld [vmem:[#allocation11 + $0x3e8] sm:$0xff]
    %v433 = vld [vmem:[#allocation11 + $0x3f0] sm:$0xff]
    %v434 = vld [vmem:[#allocation11 + $0x3f8] sm:$0xff]
    %v435 = vld [vmem:[#allocation13] sm:$0xf]
    %v437 = vperm.slane %v435, 0
    %v438 = vperm.slane %v435, 1
    %v439 = vperm.slane %v435, 2
    %v440 = vperm.slane %v435, 3
    %445 = vmatpush.msra.mxu0 %v367
    %446 = vmatpush.msra.mxu0 %v363
    %447 = vmatpush.msra.mxu0 %v359
    %448 = vmatpush.msra.mxu0 %v355
    %449 = vmatpush.msra.mxu0 %v351
    %450 = vmatpush.msra.mxu0 %v347
    %451 = vmatpush.msra.mxu0 %v343
    %452 = vmatpush.msra.mxu0 %v339
    %453 = vmatpush.msra.mxu0 %v335
    %454 = vmatpush.msra.mxu0 %v331
    %455 = vmatpush.msra.mxu0 %v327
    %456 = vmatpush.msra.mxu0 %v323
    %457 = vmatpush.msra.mxu0 %v319
    %458 = vmatpush.msra.mxu0 %v315
    %459 = vmatpush.msra.mxu0 %v311
    %460 = vmatpush.msra.mxu0 %v307
    %461 = vmatmul.f32.gmra.mxu0 %v303
    %v462 = vpop.f32.mrf.mxu0
    %v463 = vadd.f32 %v437, %v462
    %464 = vmatmul.f32.gmra.mxu0 %v305
    %v465 = vpop.f32.mrf.mxu0
    %v466 = vadd.f32 %v437, %v465
    %467 = vdwg.mxu0
    %468 = vmatpush.msra.mxu0 %v431
    %469 = vmatpush.msra.mxu0 %v427
    %470 = vmatpush.msra.mxu0 %v423
    %471 = vmatpush.msra.mxu0 %v419
    %472 = vmatpush.msra.mxu0 %v415
    %473 = vmatpush.msra.mxu0 %v411
    %474 = vmatpush.msra.mxu0 %v407
    %475 = vmatpush.msra.mxu0 %v403
    %476 = vmatpush.msra.mxu0 %v399
    %477 = vmatpush.msra.mxu0 %v395
    %478 = vmatpush.msra.mxu0 %v391
    %479 = vmatpush.msra.mxu0 %v387
    %480 = vmatpush.msra.mxu0 %v383
    %481 = vmatpush.msra.mxu0 %v379
    %482 = vmatpush.msra.mxu0 %v375
    %483 = vmatpush.msra.mxu0 %v371
    %484 = vmatmul.f32.gmra.mxu0 %v304
    %v485 = vpop.f32.mrf.mxu0
    %v486 = vadd.f32 %v463, %v485
    %487 = vmatmul.f32.gmra.mxu0 %v306
    %v488 = vpop.f32.mrf.mxu0
    %v489 = vadd.f32 %v466, %v488
    %490 = vdwg.mxu0
    %491 = vmatpush.msra.mxu0 %v368
    %492 = vmatpush.msra.mxu0 %v364
    %493 = vmatpush.msra.mxu0 %v360
    %494 = vmatpush.msra.mxu0 %v356
    %495 = vmatpush.msra.mxu0 %v352
    %496 = vmatpush.msra.mxu0 %v348
    %497 = vmatpush.msra.mxu0 %v344
    %498 = vmatpush.msra.mxu0 %v340
    %499 = vmatpush.msra.mxu0 %v336
    %500 = vmatpush.msra.mxu0 %v332
    %501 = vmatpush.msra.mxu0 %v328
    %502 = vmatpush.msra.mxu0 %v324
    %503 = vmatpush.msra.mxu0 %v320
    %504 = vmatpush.msra.mxu0 %v316
    %505 = vmatpush.msra.mxu0 %v312
    %506 = vmatpush.msra.mxu0 %v308
    %507 = vmatmul.f32.gmra.mxu0 %v303
    %v508 = vpop.f32.mrf.mxu0
    %v509 = vadd.f32 %v438, %v508
    %510 = vmatmul.f32.gmra.mxu0 %v305
    %v511 = vpop.f32.mrf.mxu0
    %v512 = vadd.f32 %v438, %v511
    %513 = vdwg.mxu0
    %514 = vmatpush.msra.mxu0 %v432
    %515 = vmatpush.msra.mxu0 %v428
    %516 = vmatpush.msra.mxu0 %v424
    %517 = vmatpush.msra.mxu0 %v420
    %518 = vmatpush.msra.mxu0 %v416
    %519 = vmatpush.msra.mxu0 %v412
    %520 = vmatpush.msra.mxu0 %v408
    %521 = vmatpush.msra.mxu0 %v404
    %522 = vmatpush.msra.mxu0 %v400
    %523 = vmatpush.msra.mxu0 %v396
    %524 = vmatpush.msra.mxu0 %v392
    %525 = vmatpush.msra.mxu0 %v388
    %526 = vmatpush.msra.mxu0 %v384
    %527 = vmatpush.msra.mxu0 %v380
    %528 = vmatpush.msra.mxu0 %v376
    %529 = vmatpush.msra.mxu0 %v372
    %530 = vmatmul.f32.gmra.mxu0 %v304
    %v531 = vpop.f32.mrf.mxu0
    %v532 = vadd.f32 %v509, %v531
    %533 = vmatmul.f32.gmra.mxu0 %v306
    %v534 = vpop.f32.mrf.mxu0
    %v535 = vadd.f32 %v512, %v534
    %536 = vdwg.mxu0
    %537 = vmatpush.msra.mxu0 %v369
    %538 = vmatpush.msra.mxu0 %v365
    %539 = vmatpush.msra.mxu0 %v361
    %540 = vmatpush.msra.mxu0 %v357
    %541 = vmatpush.msra.mxu0 %v353
    %542 = vmatpush.msra.mxu0 %v349
    %543 = vmatpush.msra.mxu0 %v345
    %544 = vmatpush.msra.mxu0 %v341
    %545 = vmatpush.msra.mxu0 %v337
    %546 = vmatpush.msra.mxu0 %v333
    %547 = vmatpush.msra.mxu0 %v329
    %548 = vmatpush.msra.mxu0 %v325
    %549 = vmatpush.msra.mxu0 %v321
    %550 = vmatpush.msra.mxu0 %v317
    %551 = vmatpush.msra.mxu0 %v313
    %552 = vmatpush.msra.mxu0 %v309
    %553 = vmatmul.f32.gmra.mxu0 %v303
    %v554 = vpop.f32.mrf.mxu0
    %v555 = vadd.f32 %v439, %v554
    %556 = vmatmul.f32.gmra.mxu0 %v305
    %v557 = vpop.f32.mrf.mxu0
    %v558 = vadd.f32 %v439, %v557
    %559 = vdwg.mxu0
    %560 = vmatpush.msra.mxu0 %v433
    %561 = vmatpush.msra.mxu0 %v429
    %562 = vmatpush.msra.mxu0 %v425
    %563 = vmatpush.msra.mxu0 %v421
    %564 = vmatpush.msra.mxu0 %v417
    %565 = vmatpush.msra.mxu0 %v413
    %566 = vmatpush.msra.mxu0 %v409
    %567 = vmatpush.msra.mxu0 %v405
    %568 = vmatpush.msra.mxu0 %v401
    %569 = vmatpush.msra.mxu0 %v397
    %570 = vmatpush.msra.mxu0 %v393
    %571 = vmatpush.msra.mxu0 %v389
    %572 = vmatpush.msra.mxu0 %v385
    %573 = vmatpush.msra.mxu0 %v381
    %574 = vmatpush.msra.mxu0 %v377
    %575 = vmatpush.msra.mxu0 %v373
    %576 = vmatmul.f32.gmra.mxu0 %v304
    %v577 = vpop.f32.mrf.mxu0
    %v578 = vadd.f32 %v555, %v577
    %579 = vmatmul.f32.gmra.mxu0 %v306
    %v580 = vpop.f32.mrf.mxu0
    %v581 = vadd.f32 %v558, %v580
    %582 = vdwg.mxu0
    %583 = vmatpush.msra.mxu0 %v370
    %584 = vmatpush.msra.mxu0 %v366
    %585 = vmatpush.msra.mxu0 %v362
    %586 = vmatpush.msra.mxu0 %v358
    %587 = vmatpush.msra.mxu0 %v354
    %588 = vmatpush.msra.mxu0 %v350
    %589 = vmatpush.msra.mxu0 %v346
    %590 = vmatpush.msra.mxu0 %v342
    %591 = vmatpush.msra.mxu0 %v338
    %592 = vmatpush.msra.mxu0 %v334
    %593 = vmatpush.msra.mxu0 %v330
    %594 = vmatpush.msra.mxu0 %v326
    %595 = vmatpush.msra.mxu0 %v322
    %596 = vmatpush.msra.mxu0 %v318
    %597 = vmatpush.msra.mxu0 %v314
    %598 = vmatpush.msra.mxu0 %v310
    %599 = vmatmul.f32.gmra.mxu0 %v303
    %v600 = vpop.f32.mrf.mxu0
    %v601 = vadd.f32 %v440, %v600
    %602 = vmatmul.f32.gmra.mxu0 %v305
    %v603 = vpop.f32.mrf.mxu0
    %v604 = vadd.f32 %v440, %v603
    %605 = vdwg.mxu0
    %606 = vmatpush.msra.mxu0 %v434
    %607 = vmatpush.msra.mxu0 %v430
    %608 = vmatpush.msra.mxu0 %v426
    %609 = vmatpush.msra.mxu0 %v422
    %610 = vmatpush.msra.mxu0 %v418
    %611 = vmatpush.msra.mxu0 %v414
    %612 = vmatpush.msra.mxu0 %v410
    %613 = vmatpush.msra.mxu0 %v406
    %614 = vmatpush.msra.mxu0 %v402
    %615 = vmatpush.msra.mxu0 %v398
    %616 = vmatpush.msra.mxu0 %v394
    %617 = vmatpush.msra.mxu0 %v390
    %618 = vmatpush.msra.mxu0 %v386
    %619 = vmatpush.msra.mxu0 %v382
    %620 = vmatpush.msra.mxu0 %v378
    %621 = vmatpush.msra.mxu0 %v374
    %622 = vmatmul.f32.gmra.mxu0 %v304
    %v623 = vpop.f32.mrf.mxu0
    %v624 = vadd.f32 %v601, %v623
    %625 = vmatmul.f32.gmra.mxu0 %v306
    %v626 = vpop.f32.mrf.mxu0
    %v627 = vadd.f32 %v604, %v626
    %628 = vdwg.mxu0
    %vm629 = vcmp.gt.f32.partialorder %v486, 0.0
    %vm630 = vcmp.gt.f32.partialorder %v532, 0.0
    %vm631 = vcmp.gt.f32.partialorder %v578, 0.0
    %vm632 = vcmp.gt.f32.partialorder %v624, 0.0
    %vm633 = vcmp.gt.f32.partialorder %v489, 0.0
    %vm634 = vcmp.gt.f32.partialorder %v535, 0.0
    %vm635 = vcmp.gt.f32.partialorder %v581, 0.0
    %vm636 = vcmp.gt.f32.partialorder %v627, 0.0
    %v637 = vmul.f32 %v486, 0.01
    %v638 = vmul.f32 %v532, 0.01
    %v639 = vmul.f32 %v578, 0.01
    %v640 = vmul.f32 %v624, 0.01
    %v641 = vmul.f32 %v489, 0.01
    %v642 = vmul.f32 %v535, 0.01
    %v643 = vmul.f32 %v581, 0.01
    %v644 = vmul.f32 %v627, 0.01
    %v645 = vsel %vm629, %v486, %v637
    %v646 = vsel %vm630, %v532, %v638
    %v647 = vsel %vm631, %v578, %v639
    %v648 = vsel %vm632, %v624, %v640
    %v649 = vsel %vm633, %v489, %v641
    %v650 = vsel %vm634, %v535, %v642
    %v651 = vsel %vm635, %v581, %v643
    %v652 = vsel %vm636, %v627, %v644
    %v653 = vld [vmem:[#allocation14] sm:$0xff]
    %v654 = vld [vmem:[#allocation14 + $0x8] sm:$0xff]
    %v655 = vld [vmem:[#allocation14 + $0x10] sm:$0xff]
    %v656 = vld [vmem:[#allocation14 + $0x18] sm:$0xff]
    %v657 = vld [vmem:[#allocation14 + $0x20] sm:$0xff]
    %v658 = vld [vmem:[#allocation14 + $0x28] sm:$0xff]
    %v659 = vld [vmem:[#allocation14 + $0x30] sm:$0xff]
    %v660 = vld [vmem:[#allocation14 + $0x38] sm:$0xff]
    %v661 = vld [vmem:[#allocation14 + $0x40] sm:$0xff]
    %v662 = vld [vmem:[#allocation14 + $0x48] sm:$0xff]
    %v663 = vld [vmem:[#allocation14 + $0x50] sm:$0xff]
    %v664 = vld [vmem:[#allocation14 + $0x58] sm:$0xff]
    %v665 = vld [vmem:[#allocation14 + $0x60] sm:$0xff]
    %v666 = vld [vmem:[#allocation14 + $0x68] sm:$0xff]
    %v667 = vld [vmem:[#allocation14 + $0x70] sm:$0xff]
    %v668 = vld [vmem:[#allocation14 + $0x78] sm:$0xff]
    %v669 = vld [vmem:[#allocation14 + $0x80] sm:$0xff]
    %v670 = vld [vmem:[#allocation14 + $0x88] sm:$0xff]
    %v671 = vld [vmem:[#allocation14 + $0x90] sm:$0xff]
    %v672 = vld [vmem:[#allocation14 + $0x98] sm:$0xff]
    %v673 = vld [vmem:[#allocation14 + $0xa0] sm:$0xff]
    %v674 = vld [vmem:[#allocation14 + $0xa8] sm:$0xff]
    %v675 = vld [vmem:[#allocation14 + $0xb0] sm:$0xff]
    %v676 = vld [vmem:[#allocation14 + $0xb8] sm:$0xff]
    %v677 = vld [vmem:[#allocation14 + $0xc0] sm:$0xff]
    %v678 = vld [vmem:[#allocation14 + $0xc8] sm:$0xff]
    %v679 = vld [vmem:[#allocation14 + $0xd0] sm:$0xff]
    %v680 = vld [vmem:[#allocation14 + $0xd8] sm:$0xff]
    %v681 = vld [vmem:[#allocation14 + $0xe0] sm:$0xff]
    %v682 = vld [vmem:[#allocation14 + $0xe8] sm:$0xff]
    %v683 = vld [vmem:[#allocation14 + $0xf0] sm:$0xff]
    %v684 = vld [vmem:[#allocation14 + $0xf8] sm:$0xff]
    %v685 = vld [vmem:[#allocation14 + $0x100] sm:$0xff]
    %v686 = vld [vmem:[#allocation14 + $0x108] sm:$0xff]
    %v687 = vld [vmem:[#allocation14 + $0x110] sm:$0xff]
    %v688 = vld [vmem:[#allocation14 + $0x118] sm:$0xff]
    %v689 = vld [vmem:[#allocation14 + $0x120] sm:$0xff]
    %v690 = vld [vmem:[#allocation14 + $0x128] sm:$0xff]
    %v691 = vld [vmem:[#allocation14 + $0x130] sm:$0xff]
    %v692 = vld [vmem:[#allocation14 + $0x138] sm:$0xff]
    %v693 = vld [vmem:[#allocation14 + $0x140] sm:$0xff]
    %v694 = vld [vmem:[#allocation14 + $0x148] sm:$0xff]
    %v695 = vld [vmem:[#allocation14 + $0x150] sm:$0xff]
    %v696 = vld [vmem:[#allocation14 + $0x158] sm:$0xff]
    %v697 = vld [vmem:[#allocation14 + $0x160] sm:$0xff]
    %v698 = vld [vmem:[#allocation14 + $0x168] sm:$0xff]
    %v699 = vld [vmem:[#allocation14 + $0x170] sm:$0xff]
    %v700 = vld [vmem:[#allocation14 + $0x178] sm:$0xff]
    %v701 = vld [vmem:[#allocation14 + $0x180] sm:$0xff]
    %v702 = vld [vmem:[#allocation14 + $0x188] sm:$0xff]
    %v703 = vld [vmem:[#allocation14 + $0x190] sm:$0xff]
    %v704 = vld [vmem:[#allocation14 + $0x198] sm:$0xff]
    %v705 = vld [vmem:[#allocation14 + $0x1a0] sm:$0xff]
    %v706 = vld [vmem:[#allocation14 + $0x1a8] sm:$0xff]
    %v707 = vld [vmem:[#allocation14 + $0x1b0] sm:$0xff]
    %v708 = vld [vmem:[#allocation14 + $0x1b8] sm:$0xff]
    %v709 = vld [vmem:[#allocation14 + $0x1c0] sm:$0xff]
    %v710 = vld [vmem:[#allocation14 + $0x1c8] sm:$0xff]
    %v711 = vld [vmem:[#allocation14 + $0x1d0] sm:$0xff]
    %v712 = vld [vmem:[#allocation14 + $0x1d8] sm:$0xff]
    %v713 = vld [vmem:[#allocation14 + $0x1e0] sm:$0xff]
    %v714 = vld [vmem:[#allocation14 + $0x1e8] sm:$0xff]
    %v715 = vld [vmem:[#allocation14 + $0x1f0] sm:$0xff]
    %v716 = vld [vmem:[#allocation14 + $0x1f8] sm:$0xff]
    %v717 = vld [vmem:[#allocation14 + $0x200] sm:$0xff]
    %v718 = vld [vmem:[#allocation14 + $0x208] sm:$0xff]
    %v719 = vld [vmem:[#allocation14 + $0x210] sm:$0xff]
    %v720 = vld [vmem:[#allocation14 + $0x218] sm:$0xff]
    %v721 = vld [vmem:[#allocation14 + $0x220] sm:$0xff]
    %v722 = vld [vmem:[#allocation14 + $0x228] sm:$0xff]
    %v723 = vld [vmem:[#allocation14 + $0x230] sm:$0xff]
    %v724 = vld [vmem:[#allocation14 + $0x238] sm:$0xff]
    %v725 = vld [vmem:[#allocation14 + $0x240] sm:$0xff]
    %v726 = vld [vmem:[#allocation14 + $0x248] sm:$0xff]
    %v727 = vld [vmem:[#allocation14 + $0x250] sm:$0xff]
    %v728 = vld [vmem:[#allocation14 + $0x258] sm:$0xff]
    %v729 = vld [vmem:[#allocation14 + $0x260] sm:$0xff]
    %v730 = vld [vmem:[#allocation14 + $0x268] sm:$0xff]
    %v731 = vld [vmem:[#allocation14 + $0x270] sm:$0xff]
    %v732 = vld [vmem:[#allocation14 + $0x278] sm:$0xff]
    %v733 = vld [vmem:[#allocation14 + $0x280] sm:$0xff]
    %v734 = vld [vmem:[#allocation14 + $0x288] sm:$0xff]
    %v735 = vld [vmem:[#allocation14 + $0x290] sm:$0xff]
    %v736 = vld [vmem:[#allocation14 + $0x298] sm:$0xff]
    %v737 = vld [vmem:[#allocation14 + $0x2a0] sm:$0xff]
    %v738 = vld [vmem:[#allocation14 + $0x2a8] sm:$0xff]
    %v739 = vld [vmem:[#allocation14 + $0x2b0] sm:$0xff]
    %v740 = vld [vmem:[#allocation14 + $0x2b8] sm:$0xff]
    %v741 = vld [vmem:[#allocation14 + $0x2c0] sm:$0xff]
    %v742 = vld [vmem:[#allocation14 + $0x2c8] sm:$0xff]
    %v743 = vld [vmem:[#allocation14 + $0x2d0] sm:$0xff]
    %v744 = vld [vmem:[#allocation14 + $0x2d8] sm:$0xff]
    %v745 = vld [vmem:[#allocation14 + $0x2e0] sm:$0xff]
    %v746 = vld [vmem:[#allocation14 + $0x2e8] sm:$0xff]
    %v747 = vld [vmem:[#allocation14 + $0x2f0] sm:$0xff]
    %v748 = vld [vmem:[#allocation14 + $0x2f8] sm:$0xff]
    %v749 = vld [vmem:[#allocation14 + $0x300] sm:$0xff]
    %v750 = vld [vmem:[#allocation14 + $0x308] sm:$0xff]
    %v751 = vld [vmem:[#allocation14 + $0x310] sm:$0xff]
    %v752 = vld [vmem:[#allocation14 + $0x318] sm:$0xff]
    %v753 = vld [vmem:[#allocation14 + $0x320] sm:$0xff]
    %v754 = vld [vmem:[#allocation14 + $0x328] sm:$0xff]
    %v755 = vld [vmem:[#allocation14 + $0x330] sm:$0xff]
    %v756 = vld [vmem:[#allocation14 + $0x338] sm:$0xff]
    %v757 = vld [vmem:[#allocation14 + $0x340] sm:$0xff]
    %v758 = vld [vmem:[#allocation14 + $0x348] sm:$0xff]
    %v759 = vld [vmem:[#allocation14 + $0x350] sm:$0xff]
    %v760 = vld [vmem:[#allocation14 + $0x358] sm:$0xff]
    %v761 = vld [vmem:[#allocation14 + $0x360] sm:$0xff]
    %v762 = vld [vmem:[#allocation14 + $0x368] sm:$0xff]
    %v763 = vld [vmem:[#allocation14 + $0x370] sm:$0xff]
    %v764 = vld [vmem:[#allocation14 + $0x378] sm:$0xff]
    %v765 = vld [vmem:[#allocation14 + $0x380] sm:$0xff]
    %v766 = vld [vmem:[#allocation14 + $0x388] sm:$0xff]
    %v767 = vld [vmem:[#allocation14 + $0x390] sm:$0xff]
    %v768 = vld [vmem:[#allocation14 + $0x398] sm:$0xff]
    %v769 = vld [vmem:[#allocation14 + $0x3a0] sm:$0xff]
    %v770 = vld [vmem:[#allocation14 + $0x3a8] sm:$0xff]
    %v771 = vld [vmem:[#allocation14 + $0x3b0] sm:$0xff]
    %v772 = vld [vmem:[#allocation14 + $0x3b8] sm:$0xff]
    %v773 = vld [vmem:[#allocation14 + $0x3c0] sm:$0xff]
    %v774 = vld [vmem:[#allocation14 + $0x3c8] sm:$0xff]
    %v775 = vld [vmem:[#allocation14 + $0x3d0] sm:$0xff]
    %v776 = vld [vmem:[#allocation14 + $0x3d8] sm:$0xff]
    %v777 = vld [vmem:[#allocation14 + $0x3e0] sm:$0xff]
    %v778 = vld [vmem:[#allocation14 + $0x3e8] sm:$0xff]
    %v779 = vld [vmem:[#allocation14 + $0x3f0] sm:$0xff]
    %v780 = vld [vmem:[#allocation14 + $0x3f8] sm:$0xff]
    %v781 = vld [vmem:[#allocation14 + $0x400] sm:$0xff]
    %v782 = vld [vmem:[#allocation14 + $0x408] sm:$0xff]
    %v783 = vld [vmem:[#allocation14 + $0x410] sm:$0xff]
    %v784 = vld [vmem:[#allocation14 + $0x418] sm:$0xff]
    %v785 = vld [vmem:[#allocation14 + $0x420] sm:$0xff]
    %v786 = vld [vmem:[#allocation14 + $0x428] sm:$0xff]
    %v787 = vld [vmem:[#allocation14 + $0x430] sm:$0xff]
    %v788 = vld [vmem:[#allocation14 + $0x438] sm:$0xff]
    %v789 = vld [vmem:[#allocation14 + $0x440] sm:$0xff]
    %v790 = vld [vmem:[#allocation14 + $0x448] sm:$0xff]
    %v791 = vld [vmem:[#allocation14 + $0x450] sm:$0xff]
    %v792 = vld [vmem:[#allocation14 + $0x458] sm:$0xff]
    %v793 = vld [vmem:[#allocation14 + $0x460] sm:$0xff]
    %v794 = vld [vmem:[#allocation14 + $0x468] sm:$0xff]
    %v795 = vld [vmem:[#allocation14 + $0x470] sm:$0xff]
    %v796 = vld [vmem:[#allocation14 + $0x478] sm:$0xff]
    %v797 = vld [vmem:[#allocation14 + $0x480] sm:$0xff]
    %v798 = vld [vmem:[#allocation14 + $0x488] sm:$0xff]
    %v799 = vld [vmem:[#allocation14 + $0x490] sm:$0xff]
    %v800 = vld [vmem:[#allocation14 + $0x498] sm:$0xff]
    %v801 = vld [vmem:[#allocation14 + $0x4a0] sm:$0xff]
    %v802 = vld [vmem:[#allocation14 + $0x4a8] sm:$0xff]
    %v803 = vld [vmem:[#allocation14 + $0x4b0] sm:$0xff]
    %v804 = vld [vmem:[#allocation14 + $0x4b8] sm:$0xff]
    %v805 = vld [vmem:[#allocation14 + $0x4c0] sm:$0xff]
    %v806 = vld [vmem:[#allocation14 + $0x4c8] sm:$0xff]
    %v807 = vld [vmem:[#allocation14 + $0x4d0] sm:$0xff]
    %v808 = vld [vmem:[#allocation14 + $0x4d8] sm:$0xff]
    %v809 = vld [vmem:[#allocation14 + $0x4e0] sm:$0xff]
    %v810 = vld [vmem:[#allocation14 + $0x4e8] sm:$0xff]
    %v811 = vld [vmem:[#allocation14 + $0x4f0] sm:$0xff]
    %v812 = vld [vmem:[#allocation14 + $0x4f8] sm:$0xff]
    %v813 = vld [vmem:[#allocation14 + $0x500] sm:$0xff]
    %v814 = vld [vmem:[#allocation14 + $0x508] sm:$0xff]
    %v815 = vld [vmem:[#allocation14 + $0x510] sm:$0xff]
    %v816 = vld [vmem:[#allocation14 + $0x518] sm:$0xff]
    %v817 = vld [vmem:[#allocation14 + $0x520] sm:$0xff]
    %v818 = vld [vmem:[#allocation14 + $0x528] sm:$0xff]
    %v819 = vld [vmem:[#allocation14 + $0x530] sm:$0xff]
    %v820 = vld [vmem:[#allocation14 + $0x538] sm:$0xff]
    %v821 = vld [vmem:[#allocation14 + $0x540] sm:$0xff]
    %v822 = vld [vmem:[#allocation14 + $0x548] sm:$0xff]
    %v823 = vld [vmem:[#allocation14 + $0x550] sm:$0xff]
    %v824 = vld [vmem:[#allocation14 + $0x558] sm:$0xff]
    %v825 = vld [vmem:[#allocation14 + $0x560] sm:$0xff]
    %v826 = vld [vmem:[#allocation14 + $0x568] sm:$0xff]
    %v827 = vld [vmem:[#allocation14 + $0x570] sm:$0xff]
    %v828 = vld [vmem:[#allocation14 + $0x578] sm:$0xff]
    %v829 = vld [vmem:[#allocation14 + $0x580] sm:$0xff]
    %v830 = vld [vmem:[#allocation14 + $0x588] sm:$0xff]
    %v831 = vld [vmem:[#allocation14 + $0x590] sm:$0xff]
    %v832 = vld [vmem:[#allocation14 + $0x598] sm:$0xff]
    %v833 = vld [vmem:[#allocation14 + $0x5a0] sm:$0xff]
    %v834 = vld [vmem:[#allocation14 + $0x5a8] sm:$0xff]
    %v835 = vld [vmem:[#allocation14 + $0x5b0] sm:$0xff]
    %v836 = vld [vmem:[#allocation14 + $0x5b8] sm:$0xff]
    %v837 = vld [vmem:[#allocation14 + $0x5c0] sm:$0xff]
    %v838 = vld [vmem:[#allocation14 + $0x5c8] sm:$0xff]
    %v839 = vld [vmem:[#allocation14 + $0x5d0] sm:$0xff]
    %v840 = vld [vmem:[#allocation14 + $0x5d8] sm:$0xff]
    %v841 = vld [vmem:[#allocation14 + $0x5e0] sm:$0xff]
    %v842 = vld [vmem:[#allocation14 + $0x5e8] sm:$0xff]
    %v843 = vld [vmem:[#allocation14 + $0x5f0] sm:$0xff]
    %v844 = vld [vmem:[#allocation14 + $0x5f8] sm:$0xff]
    %v845 = vld [vmem:[#allocation14 + $0x600] sm:$0xff]
    %v846 = vld [vmem:[#allocation14 + $0x608] sm:$0xff]
    %v847 = vld [vmem:[#allocation14 + $0x610] sm:$0xff]
    %v848 = vld [vmem:[#allocation14 + $0x618] sm:$0xff]
    %v849 = vld [vmem:[#allocation14 + $0x620] sm:$0xff]
    %v850 = vld [vmem:[#allocation14 + $0x628] sm:$0xff]
    %v851 = vld [vmem:[#allocation14 + $0x630] sm:$0xff]
    %v852 = vld [vmem:[#allocation14 + $0x638] sm:$0xff]
    %v853 = vld [vmem:[#allocation14 + $0x640] sm:$0xff]
    %v854 = vld [vmem:[#allocation14 + $0x648] sm:$0xff]
    %v855 = vld [vmem:[#allocation14 + $0x650] sm:$0xff]
    %v856 = vld [vmem:[#allocation14 + $0x658] sm:$0xff]
    %v857 = vld [vmem:[#allocation14 + $0x660] sm:$0xff]
    %v858 = vld [vmem:[#allocation14 + $0x668] sm:$0xff]
    %v859 = vld [vmem:[#allocation14 + $0x670] sm:$0xff]
    %v860 = vld [vmem:[#allocation14 + $0x678] sm:$0xff]
    %v861 = vld [vmem:[#allocation14 + $0x680] sm:$0xff]
    %v862 = vld [vmem:[#allocation14 + $0x688] sm:$0xff]
    %v863 = vld [vmem:[#allocation14 + $0x690] sm:$0xff]
    %v864 = vld [vmem:[#allocation14 + $0x698] sm:$0xff]
    %v865 = vld [vmem:[#allocation14 + $0x6a0] sm:$0xff]
    %v866 = vld [vmem:[#allocation14 + $0x6a8] sm:$0xff]
    %v867 = vld [vmem:[#allocation14 + $0x6b0] sm:$0xff]
    %v868 = vld [vmem:[#allocation14 + $0x6b8] sm:$0xff]
    %v869 = vld [vmem:[#allocation14 + $0x6c0] sm:$0xff]
    %v870 = vld [vmem:[#allocation14 + $0x6c8] sm:$0xff]
    %v871 = vld [vmem:[#allocation14 + $0x6d0] sm:$0xff]
    %v872 = vld [vmem:[#allocation14 + $0x6d8] sm:$0xff]
    %v873 = vld [vmem:[#allocation14 + $0x6e0] sm:$0xff]
    %v874 = vld [vmem:[#allocation14 + $0x6e8] sm:$0xff]
    %v875 = vld [vmem:[#allocation14 + $0x6f0] sm:$0xff]
    %v876 = vld [vmem:[#allocation14 + $0x6f8] sm:$0xff]
    %v877 = vld [vmem:[#allocation14 + $0x700] sm:$0xff]
    %v878 = vld [vmem:[#allocation14 + $0x708] sm:$0xff]
    %v879 = vld [vmem:[#allocation14 + $0x710] sm:$0xff]
    %v880 = vld [vmem:[#allocation14 + $0x718] sm:$0xff]
    %v881 = vld [vmem:[#allocation14 + $0x720] sm:$0xff]
    %v882 = vld [vmem:[#allocation14 + $0x728] sm:$0xff]
    %v883 = vld [vmem:[#allocation14 + $0x730] sm:$0xff]
    %v884 = vld [vmem:[#allocation14 + $0x738] sm:$0xff]
    %v885 = vld [vmem:[#allocation14 + $0x740] sm:$0xff]
    %v886 = vld [vmem:[#allocation14 + $0x748] sm:$0xff]
    %v887 = vld [vmem:[#allocation14 + $0x750] sm:$0xff]
    %v888 = vld [vmem:[#allocation14 + $0x758] sm:$0xff]
    %v889 = vld [vmem:[#allocation14 + $0x760] sm:$0xff]
    %v890 = vld [vmem:[#allocation14 + $0x768] sm:$0xff]
    %v891 = vld [vmem:[#allocation14 + $0x770] sm:$0xff]
    %v892 = vld [vmem:[#allocation14 + $0x778] sm:$0xff]
    %v893 = vld [vmem:[#allocation14 + $0x780] sm:$0xff]
    %v894 = vld [vmem:[#allocation14 + $0x788] sm:$0xff]
    %v895 = vld [vmem:[#allocation14 + $0x790] sm:$0xff]
    %v896 = vld [vmem:[#allocation14 + $0x798] sm:$0xff]
    %v897 = vld [vmem:[#allocation14 + $0x7a0] sm:$0xff]
    %v898 = vld [vmem:[#allocation14 + $0x7a8] sm:$0xff]
    %v899 = vld [vmem:[#allocation14 + $0x7b0] sm:$0xff]
    %v900 = vld [vmem:[#allocation14 + $0x7b8] sm:$0xff]
    %v901 = vld [vmem:[#allocation14 + $0x7c0] sm:$0xff]
    %v902 = vld [vmem:[#allocation14 + $0x7c8] sm:$0xff]
    %v903 = vld [vmem:[#allocation14 + $0x7d0] sm:$0xff]
    %v904 = vld [vmem:[#allocation14 + $0x7d8] sm:$0xff]
    %v905 = vld [vmem:[#allocation14 + $0x7e0] sm:$0xff]
    %v906 = vld [vmem:[#allocation14 + $0x7e8] sm:$0xff]
    %v907 = vld [vmem:[#allocation14 + $0x7f0] sm:$0xff]
    %v908 = vld [vmem:[#allocation14 + $0x7f8] sm:$0xff]
    %v909 = vld [vmem:[#allocation14 + $0x800] sm:$0xff]
    %v910 = vld [vmem:[#allocation14 + $0x808] sm:$0xff]
    %v911 = vld [vmem:[#allocation14 + $0x810] sm:$0xff]
    %v912 = vld [vmem:[#allocation14 + $0x818] sm:$0xff]
    %v913 = vld [vmem:[#allocation14 + $0x820] sm:$0xff]
    %v914 = vld [vmem:[#allocation14 + $0x828] sm:$0xff]
    %v915 = vld [vmem:[#allocation14 + $0x830] sm:$0xff]
    %v916 = vld [vmem:[#allocation14 + $0x838] sm:$0xff]
    %v917 = vld [vmem:[#allocation14 + $0x840] sm:$0xff]
    %v918 = vld [vmem:[#allocation14 + $0x848] sm:$0xff]
    %v919 = vld [vmem:[#allocation14 + $0x850] sm:$0xff]
    %v920 = vld [vmem:[#allocation14 + $0x858] sm:$0xff]
    %v921 = vld [vmem:[#allocation14 + $0x860] sm:$0xff]
    %v922 = vld [vmem:[#allocation14 + $0x868] sm:$0xff]
    %v923 = vld [vmem:[#allocation14 + $0x870] sm:$0xff]
    %v924 = vld [vmem:[#allocation14 + $0x878] sm:$0xff]
    %v925 = vld [vmem:[#allocation14 + $0x880] sm:$0xff]
    %v926 = vld [vmem:[#allocation14 + $0x888] sm:$0xff]
    %v927 = vld [vmem:[#allocation14 + $0x890] sm:$0xff]
    %v928 = vld [vmem:[#allocation14 + $0x898] sm:$0xff]
    %v929 = vld [vmem:[#allocation14 + $0x8a0] sm:$0xff]
    %v930 = vld [vmem:[#allocation14 + $0x8a8] sm:$0xff]
    %v931 = vld [vmem:[#allocation14 + $0x8b0] sm:$0xff]
    %v932 = vld [vmem:[#allocation14 + $0x8b8] sm:$0xff]
    %v933 = vld [vmem:[#allocation14 + $0x8c0] sm:$0xff]
    %v934 = vld [vmem:[#allocation14 + $0x8c8] sm:$0xff]
    %v935 = vld [vmem:[#allocation14 + $0x8d0] sm:$0xff]
    %v936 = vld [vmem:[#allocation14 + $0x8d8] sm:$0xff]
    %v937 = vld [vmem:[#allocation14 + $0x8e0] sm:$0xff]
    %v938 = vld [vmem:[#allocation14 + $0x8e8] sm:$0xff]
    %v939 = vld [vmem:[#allocation14 + $0x8f0] sm:$0xff]
    %v940 = vld [vmem:[#allocation14 + $0x8f8] sm:$0xff]
    %v941 = vld [vmem:[#allocation14 + $0x900] sm:$0xff]
    %v942 = vld [vmem:[#allocation14 + $0x908] sm:$0xff]
    %v943 = vld [vmem:[#allocation14 + $0x910] sm:$0xff]
    %v944 = vld [vmem:[#allocation14 + $0x918] sm:$0xff]
    %v945 = vld [vmem:[#allocation14 + $0x920] sm:$0xff]
    %v946 = vld [vmem:[#allocation14 + $0x928] sm:$0xff]
    %v947 = vld [vmem:[#allocation14 + $0x930] sm:$0xff]
    %v948 = vld [vmem:[#allocation14 + $0x938] sm:$0xff]
    %v949 = vld [vmem:[#allocation14 + $0x940] sm:$0xff]
    %v950 = vld [vmem:[#allocation14 + $0x948] sm:$0xff]
    %v951 = vld [vmem:[#allocation14 + $0x950] sm:$0xff]
    %v952 = vld [vmem:[#allocation14 + $0x958] sm:$0xff]
    %v953 = vld [vmem:[#allocation14 + $0x960] sm:$0xff]
    %v954 = vld [vmem:[#allocation14 + $0x968] sm:$0xff]
    %v955 = vld [vmem:[#allocation14 + $0x970] sm:$0xff]
    %v956 = vld [vmem:[#allocation14 + $0x978] sm:$0xff]
    %v957 = vld [vmem:[#allocation14 + $0x980] sm:$0xff]
    %v958 = vld [vmem:[#allocation14 + $0x988] sm:$0xff]
    %v959 = vld [vmem:[#allocation14 + $0x990] sm:$0xff]
    %v960 = vld [vmem:[#allocation14 + $0x998] sm:$0xff]
    %v961 = vld [vmem:[#allocation14 + $0x9a0] sm:$0xff]
    %v962 = vld [vmem:[#allocation14 + $0x9a8] sm:$0xff]
    %v963 = vld [vmem:[#allocation14 + $0x9b0] sm:$0xff]
    %v964 = vld [vmem:[#allocation14 + $0x9b8] sm:$0xff]
    %v965 = vld [vmem:[#allocation14 + $0x9c0] sm:$0xff]
    %v966 = vld [vmem:[#allocation14 + $0x9c8] sm:$0xff]
    %v967 = vld [vmem:[#allocation14 + $0x9d0] sm:$0xff]
    %v968 = vld [vmem:[#allocation14 + $0x9d8] sm:$0xff]
    %v969 = vld [vmem:[#allocation14 + $0x9e0] sm:$0xff]
    %v970 = vld [vmem:[#allocation14 + $0x9e8] sm:$0xff]
    %v971 = vld [vmem:[#allocation14 + $0x9f0] sm:$0xff]
    %v972 = vld [vmem:[#allocation14 + $0x9f8] sm:$0xff]
    %v973 = vld [vmem:[#allocation14 + $0xa00] sm:$0xff]
    %v974 = vld [vmem:[#allocation14 + $0xa08] sm:$0xff]
    %v975 = vld [vmem:[#allocation14 + $0xa10] sm:$0xff]
    %v976 = vld [vmem:[#allocation14 + $0xa18] sm:$0xff]
    %v977 = vld [vmem:[#allocation14 + $0xa20] sm:$0xff]
    %v978 = vld [vmem:[#allocation14 + $0xa28] sm:$0xff]
    %v979 = vld [vmem:[#allocation14 + $0xa30] sm:$0xff]
    %v980 = vld [vmem:[#allocation14 + $0xa38] sm:$0xff]
    %v981 = vld [vmem:[#allocation14 + $0xa40] sm:$0xff]
    %v982 = vld [vmem:[#allocation14 + $0xa48] sm:$0xff]
    %v983 = vld [vmem:[#allocation14 + $0xa50] sm:$0xff]
    %v984 = vld [vmem:[#allocation14 + $0xa58] sm:$0xff]
    %v985 = vld [vmem:[#allocation14 + $0xa60] sm:$0xff]
    %v986 = vld [vmem:[#allocation14 + $0xa68] sm:$0xff]
    %v987 = vld [vmem:[#allocation14 + $0xa70] sm:$0xff]
    %v988 = vld [vmem:[#allocation14 + $0xa78] sm:$0xff]
    %v989 = vld [vmem:[#allocation14 + $0xa80] sm:$0xff]
    %v990 = vld [vmem:[#allocation14 + $0xa88] sm:$0xff]
    %v991 = vld [vmem:[#allocation14 + $0xa90] sm:$0xff]
    %v992 = vld [vmem:[#allocation14 + $0xa98] sm:$0xff]
    %v993 = vld [vmem:[#allocation14 + $0xaa0] sm:$0xff]
    %v994 = vld [vmem:[#allocation14 + $0xaa8] sm:$0xff]
    %v995 = vld [vmem:[#allocation14 + $0xab0] sm:$0xff]
    %v996 = vld [vmem:[#allocation14 + $0xab8] sm:$0xff]
    %v997 = vld [vmem:[#allocation14 + $0xac0] sm:$0xff]
    %v998 = vld [vmem:[#allocation14 + $0xac8] sm:$0xff]
    %v999 = vld [vmem:[#allocation14 + $0xad0] sm:$0xff]
    %v1000 = vld [vmem:[#allocation14 + $0xad8] sm:$0xff]
    %v1001 = vld [vmem:[#allocation14 + $0xae0] sm:$0xff]
    %v1002 = vld [vmem:[#allocation14 + $0xae8] sm:$0xff]
    %v1003 = vld [vmem:[#allocation14 + $0xaf0] sm:$0xff]
    %v1004 = vld [vmem:[#allocation14 + $0xaf8] sm:$0xff]
    %v1005 = vld [vmem:[#allocation14 + $0xb00] sm:$0xff]
    %v1006 = vld [vmem:[#allocation14 + $0xb08] sm:$0xff]
    %v1007 = vld [vmem:[#allocation14 + $0xb10] sm:$0xff]
    %v1008 = vld [vmem:[#allocation14 + $0xb18] sm:$0xff]
    %v1009 = vld [vmem:[#allocation14 + $0xb20] sm:$0xff]
    %v1010 = vld [vmem:[#allocation14 + $0xb28] sm:$0xff]
    %v1011 = vld [vmem:[#allocation14 + $0xb30] sm:$0xff]
    %v1012 = vld [vmem:[#allocation14 + $0xb38] sm:$0xff]
    %v1013 = vld [vmem:[#allocation14 + $0xb40] sm:$0xff]
    %v1014 = vld [vmem:[#allocation14 + $0xb48] sm:$0xff]
    %v1015 = vld [vmem:[#allocation14 + $0xb50] sm:$0xff]
    %v1016 = vld [vmem:[#allocation14 + $0xb58] sm:$0xff]
    %v1017 = vld [vmem:[#allocation14 + $0xb60] sm:$0xff]
    %v1018 = vld [vmem:[#allocation14 + $0xb68] sm:$0xff]
    %v1019 = vld [vmem:[#allocation14 + $0xb70] sm:$0xff]
    %v1020 = vld [vmem:[#allocation14 + $0xb78] sm:$0xff]
    %v1021 = vld [vmem:[#allocation14 + $0xb80] sm:$0xff]
    %v1022 = vld [vmem:[#allocation14 + $0xb88] sm:$0xff]
    %v1023 = vld [vmem:[#allocation14 + $0xb90] sm:$0xff]
    %v1024 = vld [vmem:[#allocation14 + $0xb98] sm:$0xff]
    %v1025 = vld [vmem:[#allocation14 + $0xba0] sm:$0xff]
    %v1026 = vld [vmem:[#allocation14 + $0xba8] sm:$0xff]
    %v1027 = vld [vmem:[#allocation14 + $0xbb0] sm:$0xff]
    %v1028 = vld [vmem:[#allocation14 + $0xbb8] sm:$0xff]
    %v1029 = vld [vmem:[#allocation14 + $0xbc0] sm:$0xff]
    %v1030 = vld [vmem:[#allocation14 + $0xbc8] sm:$0xff]
    %v1031 = vld [vmem:[#allocation14 + $0xbd0] sm:$0xff]
    %v1032 = vld [vmem:[#allocation14 + $0xbd8] sm:$0xff]
    %v1033 = vld [vmem:[#allocation14 + $0xbe0] sm:$0xff]
    %v1034 = vld [vmem:[#allocation14 + $0xbe8] sm:$0xff]
    %v1035 = vld [vmem:[#allocation14 + $0xbf0] sm:$0xff]
    %v1036 = vld [vmem:[#allocation14 + $0xbf8] sm:$0xff]
    %v1037 = vld [vmem:[#allocation14 + $0xc00] sm:$0xff]
    %v1038 = vld [vmem:[#allocation14 + $0xc08] sm:$0xff]
    %v1039 = vld [vmem:[#allocation14 + $0xc10] sm:$0xff]
    %v1040 = vld [vmem:[#allocation14 + $0xc18] sm:$0xff]
    %v1041 = vld [vmem:[#allocation14 + $0xc20] sm:$0xff]
    %v1042 = vld [vmem:[#allocation14 + $0xc28] sm:$0xff]
    %v1043 = vld [vmem:[#allocation14 + $0xc30] sm:$0xff]
    %v1044 = vld [vmem:[#allocation14 + $0xc38] sm:$0xff]
    %v1045 = vld [vmem:[#allocation14 + $0xc40] sm:$0xff]
    %v1046 = vld [vmem:[#allocation14 + $0xc48] sm:$0xff]
    %v1047 = vld [vmem:[#allocation14 + $0xc50] sm:$0xff]
    %v1048 = vld [vmem:[#allocation14 + $0xc58] sm:$0xff]
    %v1049 = vld [vmem:[#allocation14 + $0xc60] sm:$0xff]
    %v1050 = vld [vmem:[#allocation14 + $0xc68] sm:$0xff]
    %v1051 = vld [vmem:[#allocation14 + $0xc70] sm:$0xff]
    %v1052 = vld [vmem:[#allocation14 + $0xc78] sm:$0xff]
    %v1053 = vld [vmem:[#allocation14 + $0xc80] sm:$0xff]
    %v1054 = vld [vmem:[#allocation14 + $0xc88] sm:$0xff]
    %v1055 = vld [vmem:[#allocation14 + $0xc90] sm:$0xff]
    %v1056 = vld [vmem:[#allocation14 + $0xc98] sm:$0xff]
    %v1057 = vld [vmem:[#allocation14 + $0xca0] sm:$0xff]
    %v1058 = vld [vmem:[#allocation14 + $0xca8] sm:$0xff]
    %v1059 = vld [vmem:[#allocation14 + $0xcb0] sm:$0xff]
    %v1060 = vld [vmem:[#allocation14 + $0xcb8] sm:$0xff]
    %v1061 = vld [vmem:[#allocation14 + $0xcc0] sm:$0xff]
    %v1062 = vld [vmem:[#allocation14 + $0xcc8] sm:$0xff]
    %v1063 = vld [vmem:[#allocation14 + $0xcd0] sm:$0xff]
    %v1064 = vld [vmem:[#allocation14 + $0xcd8] sm:$0xff]
    %v1065 = vld [vmem:[#allocation14 + $0xce0] sm:$0xff]
    %v1066 = vld [vmem:[#allocation14 + $0xce8] sm:$0xff]
    %v1067 = vld [vmem:[#allocation14 + $0xcf0] sm:$0xff]
    %v1068 = vld [vmem:[#allocation14 + $0xcf8] sm:$0xff]
    %v1069 = vld [vmem:[#allocation14 + $0xd00] sm:$0xff]
    %v1070 = vld [vmem:[#allocation14 + $0xd08] sm:$0xff]
    %v1071 = vld [vmem:[#allocation14 + $0xd10] sm:$0xff]
    %v1072 = vld [vmem:[#allocation14 + $0xd18] sm:$0xff]
    %v1073 = vld [vmem:[#allocation14 + $0xd20] sm:$0xff]
    %v1074 = vld [vmem:[#allocation14 + $0xd28] sm:$0xff]
    %v1075 = vld [vmem:[#allocation14 + $0xd30] sm:$0xff]
    %v1076 = vld [vmem:[#allocation14 + $0xd38] sm:$0xff]
    %v1077 = vld [vmem:[#allocation14 + $0xd40] sm:$0xff]
    %v1078 = vld [vmem:[#allocation14 + $0xd48] sm:$0xff]
    %v1079 = vld [vmem:[#allocation14 + $0xd50] sm:$0xff]
    %v1080 = vld [vmem:[#allocation14 + $0xd58] sm:$0xff]
    %v1081 = vld [vmem:[#allocation14 + $0xd60] sm:$0xff]
    %v1082 = vld [vmem:[#allocation14 + $0xd68] sm:$0xff]
    %v1083 = vld [vmem:[#allocation14 + $0xd70] sm:$0xff]
    %v1084 = vld [vmem:[#allocation14 + $0xd78] sm:$0xff]
    %v1085 = vld [vmem:[#allocation14 + $0xd80] sm:$0xff]
    %v1086 = vld [vmem:[#allocation14 + $0xd88] sm:$0xff]
    %v1087 = vld [vmem:[#allocation14 + $0xd90] sm:$0xff]
    %v1088 = vld [vmem:[#allocation14 + $0xd98] sm:$0xff]
    %v1089 = vld [vmem:[#allocation14 + $0xda0] sm:$0xff]
    %v1090 = vld [vmem:[#allocation14 + $0xda8] sm:$0xff]
    %v1091 = vld [vmem:[#allocation14 + $0xdb0] sm:$0xff]
    %v1092 = vld [vmem:[#allocation14 + $0xdb8] sm:$0xff]
    %v1093 = vld [vmem:[#allocation14 + $0xdc0] sm:$0xff]
    %v1094 = vld [vmem:[#allocation14 + $0xdc8] sm:$0xff]
    %v1095 = vld [vmem:[#allocation14 + $0xdd0] sm:$0xff]
    %v1096 = vld [vmem:[#allocation14 + $0xdd8] sm:$0xff]
    %v1097 = vld [vmem:[#allocation14 + $0xde0] sm:$0xff]
    %v1098 = vld [vmem:[#allocation14 + $0xde8] sm:$0xff]
    %v1099 = vld [vmem:[#allocation14 + $0xdf0] sm:$0xff]
    %v1100 = vld [vmem:[#allocation14 + $0xdf8] sm:$0xff]
    %v1101 = vld [vmem:[#allocation14 + $0xe00] sm:$0xff]
    %v1102 = vld [vmem:[#allocation14 + $0xe08] sm:$0xff]
    %v1103 = vld [vmem:[#allocation14 + $0xe10] sm:$0xff]
    %v1104 = vld [vmem:[#allocation14 + $0xe18] sm:$0xff]
    %v1105 = vld [vmem:[#allocation14 + $0xe20] sm:$0xff]
    %v1106 = vld [vmem:[#allocation14 + $0xe28] sm:$0xff]
    %v1107 = vld [vmem:[#allocation14 + $0xe30] sm:$0xff]
    %v1108 = vld [vmem:[#allocation14 + $0xe38] sm:$0xff]
    %v1109 = vld [vmem:[#allocation14 + $0xe40] sm:$0xff]
    %v1110 = vld [vmem:[#allocation14 + $0xe48] sm:$0xff]
    %v1111 = vld [vmem:[#allocation14 + $0xe50] sm:$0xff]
    %v1112 = vld [vmem:[#allocation14 + $0xe58] sm:$0xff]
    %v1113 = vld [vmem:[#allocation14 + $0xe60] sm:$0xff]
    %v1114 = vld [vmem:[#allocation14 + $0xe68] sm:$0xff]
    %v1115 = vld [vmem:[#allocation14 + $0xe70] sm:$0xff]
    %v1116 = vld [vmem:[#allocation14 + $0xe78] sm:$0xff]
    %v1117 = vld [vmem:[#allocation14 + $0xe80] sm:$0xff]
    %v1118 = vld [vmem:[#allocation14 + $0xe88] sm:$0xff]
    %v1119 = vld [vmem:[#allocation14 + $0xe90] sm:$0xff]
    %v1120 = vld [vmem:[#allocation14 + $0xe98] sm:$0xff]
    %v1121 = vld [vmem:[#allocation14 + $0xea0] sm:$0xff]
    %v1122 = vld [vmem:[#allocation14 + $0xea8] sm:$0xff]
    %v1123 = vld [vmem:[#allocation14 + $0xeb0] sm:$0xff]
    %v1124 = vld [vmem:[#allocation14 + $0xeb8] sm:$0xff]
    %v1125 = vld [vmem:[#allocation14 + $0xec0] sm:$0xff]
    %v1126 = vld [vmem:[#allocation14 + $0xec8] sm:$0xff]
    %v1127 = vld [vmem:[#allocation14 + $0xed0] sm:$0xff]
    %v1128 = vld [vmem:[#allocation14 + $0xed8] sm:$0xff]
    %v1129 = vld [vmem:[#allocation14 + $0xee0] sm:$0xff]
    %v1130 = vld [vmem:[#allocation14 + $0xee8] sm:$0xff]
    %v1131 = vld [vmem:[#allocation14 + $0xef0] sm:$0xff]
    %v1132 = vld [vmem:[#allocation14 + $0xef8] sm:$0xff]
    %v1133 = vld [vmem:[#allocation14 + $0xf00] sm:$0xff]
    %v1134 = vld [vmem:[#allocation14 + $0xf08] sm:$0xff]
    %v1135 = vld [vmem:[#allocation14 + $0xf10] sm:$0xff]
    %v1136 = vld [vmem:[#allocation14 + $0xf18] sm:$0xff]
    %v1137 = vld [vmem:[#allocation14 + $0xf20] sm:$0xff]
    %v1138 = vld [vmem:[#allocation14 + $0xf28] sm:$0xff]
    %v1139 = vld [vmem:[#allocation14 + $0xf30] sm:$0xff]
    %v1140 = vld [vmem:[#allocation14 + $0xf38] sm:$0xff]
    %v1141 = vld [vmem:[#allocation14 + $0xf40] sm:$0xff]
    %v1142 = vld [vmem:[#allocation14 + $0xf48] sm:$0xff]
    %v1143 = vld [vmem:[#allocation14 + $0xf50] sm:$0xff]
    %v1144 = vld [vmem:[#allocation14 + $0xf58] sm:$0xff]
    %v1145 = vld [vmem:[#allocation14 + $0xf60] sm:$0xff]
    %v1146 = vld [vmem:[#allocation14 + $0xf68] sm:$0xff]
    %v1147 = vld [vmem:[#allocation14 + $0xf70] sm:$0xff]
    %v1148 = vld [vmem:[#allocation14 + $0xf78] sm:$0xff]
    %v1149 = vld [vmem:[#allocation14 + $0xf80] sm:$0xff]
    %v1150 = vld [vmem:[#allocation14 + $0xf88] sm:$0xff]
    %v1151 = vld [vmem:[#allocation14 + $0xf90] sm:$0xff]
    %v1152 = vld [vmem:[#allocation14 + $0xf98] sm:$0xff]
    %v1153 = vld [vmem:[#allocation14 + $0xfa0] sm:$0xff]
    %v1154 = vld [vmem:[#allocation14 + $0xfa8] sm:$0xff]
    %v1155 = vld [vmem:[#allocation14 + $0xfb0] sm:$0xff]
    %v1156 = vld [vmem:[#allocation14 + $0xfb8] sm:$0xff]
    %v1157 = vld [vmem:[#allocation14 + $0xfc0] sm:$0xff]
    %v1158 = vld [vmem:[#allocation14 + $0xfc8] sm:$0xff]
    %v1159 = vld [vmem:[#allocation14 + $0xfd0] sm:$0xff]
    %v1160 = vld [vmem:[#allocation14 + $0xfd8] sm:$0xff]
    %v1161 = vld [vmem:[#allocation14 + $0xfe0] sm:$0xff]
    %v1162 = vld [vmem:[#allocation14 + $0xfe8] sm:$0xff]
    %v1163 = vld [vmem:[#allocation14 + $0xff0] sm:$0xff]
    %v1164 = vld [vmem:[#allocation14 + $0xff8] sm:$0xff]
    %v1165 = vld [vmem:[#allocation16] sm:$0xff]
    %v1167 = vperm.slane %v1165, 0
    %v1168 = vperm.slane %v1165, 1
    %v1169 = vperm.slane %v1165, 2
    %v1170 = vperm.slane %v1165, 3
    %v1171 = vperm.slane %v1165, 4
    %v1172 = vperm.slane %v1165, 5
    %v1173 = vperm.slane %v1165, 6
    %v1174 = vperm.slane %v1165, 7
    %1183 = vmatpush.msra.mxu0 %v773
    %1184 = vmatpush.msra.mxu0 %v765
    %1185 = vmatpush.msra.mxu0 %v757
    %1186 = vmatpush.msra.mxu0 %v749
    %1187 = vmatpush.msra.mxu0 %v741
    %1188 = vmatpush.msra.mxu0 %v733
    %1189 = vmatpush.msra.mxu0 %v725
    %1190 = vmatpush.msra.mxu0 %v717
    %1191 = vmatpush.msra.mxu0 %v709
    %1192 = vmatpush.msra.mxu0 %v701
    %1193 = vmatpush.msra.mxu0 %v693
    %1194 = vmatpush.msra.mxu0 %v685
    %1195 = vmatpush.msra.mxu0 %v677
    %1196 = vmatpush.msra.mxu0 %v669
    %1197 = vmatpush.msra.mxu0 %v661
    %1198 = vmatpush.msra.mxu0 %v653
    %1199 = vmatmul.f32.gmra.mxu0 %v645
    %v1200 = vpop.f32.mrf.mxu0
    %v1201 = vadd.f32 %v1167, %v1200
    %1202 = vmatmul.f32.gmra.mxu0 %v649
    %v1203 = vpop.f32.mrf.mxu0
    %v1204 = vadd.f32 %v1167, %v1203
    %1205 = vdwg.mxu0
    %1206 = vmatpush.msra.mxu0 %v901
    %1207 = vmatpush.msra.mxu0 %v893
    %1208 = vmatpush.msra.mxu0 %v885
    %1209 = vmatpush.msra.mxu0 %v877
    %1210 = vmatpush.msra.mxu0 %v869
    %1211 = vmatpush.msra.mxu0 %v861
    %1212 = vmatpush.msra.mxu0 %v853
    %1213 = vmatpush.msra.mxu0 %v845
    %1214 = vmatpush.msra.mxu0 %v837
    %1215 = vmatpush.msra.mxu0 %v829
    %1216 = vmatpush.msra.mxu0 %v821
    %1217 = vmatpush.msra.mxu0 %v813
    %1218 = vmatpush.msra.mxu0 %v805
    %1219 = vmatpush.msra.mxu0 %v797
    %1220 = vmatpush.msra.mxu0 %v789
    %1221 = vmatpush.msra.mxu0 %v781
    %1222 = vmatmul.f32.gmra.mxu0 %v646
    %v1223 = vpop.f32.mrf.mxu0
    %v1224 = vadd.f32 %v1201, %v1223
    %1225 = vmatmul.f32.gmra.mxu0 %v650
    %v1226 = vpop.f32.mrf.mxu0
    %v1227 = vadd.f32 %v1204, %v1226
    %1228 = vdwg.mxu0
    %1229 = vmatpush.msra.mxu0 %v1029
    %1230 = vmatpush.msra.mxu0 %v1021
    %1231 = vmatpush.msra.mxu0 %v1013
    %1232 = vmatpush.msra.mxu0 %v1005
    %1233 = vmatpush.msra.mxu0 %v997
    %1234 = vmatpush.msra.mxu0 %v989
    %1235 = vmatpush.msra.mxu0 %v981
    %1236 = vmatpush.msra.mxu0 %v973
    %1237 = vmatpush.msra.mxu0 %v965
    %1238 = vmatpush.msra.mxu0 %v957
    %1239 = vmatpush.msra.mxu0 %v949
    %1240 = vmatpush.msra.mxu0 %v941
    %1241 = vmatpush.msra.mxu0 %v933
    %1242 = vmatpush.msra.mxu0 %v925
    %1243 = vmatpush.msra.mxu0 %v917
    %1244 = vmatpush.msra.mxu0 %v909
    %1245 = vmatmul.f32.gmra.mxu0 %v647
    %v1246 = vpop.f32.mrf.mxu0
    %v1247 = vadd.f32 %v1224, %v1246
    %1248 = vmatmul.f32.gmra.mxu0 %v651
    %v1249 = vpop.f32.mrf.mxu0
    %v1250 = vadd.f32 %v1227, %v1249
    %1251 = vdwg.mxu0
    %1252 = vmatpush.msra.mxu0 %v1157
    %1253 = vmatpush.msra.mxu0 %v1149
    %1254 = vmatpush.msra.mxu0 %v1141
    %1255 = vmatpush.msra.mxu0 %v1133
    %1256 = vmatpush.msra.mxu0 %v1125
    %1257 = vmatpush.msra.mxu0 %v1117
    %1258 = vmatpush.msra.mxu0 %v1109
    %1259 = vmatpush.msra.mxu0 %v1101
    %1260 = vmatpush.msra.mxu0 %v1093
    %1261 = vmatpush.msra.mxu0 %v1085
    %1262 = vmatpush.msra.mxu0 %v1077
    %1263 = vmatpush.msra.mxu0 %v1069
    %1264 = vmatpush.msra.mxu0 %v1061
    %1265 = vmatpush.msra.mxu0 %v1053
    %1266 = vmatpush.msra.mxu0 %v1045
    %1267 = vmatpush.msra.mxu0 %v1037
    %1268 = vmatmul.f32.gmra.mxu0 %v648
    %v1269 = vpop.f32.mrf.mxu0
    %v1270 = vadd.f32 %v1247, %v1269
    %1271 = vmatmul.f32.gmra.mxu0 %v652
    %v1272 = vpop.f32.mrf.mxu0
    %v1273 = vadd.f32 %v1250, %v1272
    %1274 = vdwg.mxu0
    %1275 = vmatpush.msra.mxu0 %v774
    %1276 = vmatpush.msra.mxu0 %v766
    %1277 = vmatpush.msra.mxu0 %v758
    %1278 = vmatpush.msra.mxu0 %v750
    %1279 = vmatpush.msra.mxu0 %v742
    %1280 = vmatpush.msra.mxu0 %v734
    %1281 = vmatpush.msra.mxu0 %v726
    %1282 = vmatpush.msra.mxu0 %v718
    %1283 = vmatpush.msra.mxu0 %v710
    %1284 = vmatpush.msra.mxu0 %v702
    %1285 = vmatpush.msra.mxu0 %v694
    %1286 = vmatpush.msra.mxu0 %v686
    %1287 = vmatpush.msra.mxu0 %v678
    %1288 = vmatpush.msra.mxu0 %v670
    %1289 = vmatpush.msra.mxu0 %v662
    %1290 = vmatpush.msra.mxu0 %v654
    %1291 = vmatmul.f32.gmra.mxu0 %v645
    %v1292 = vpop.f32.mrf.mxu0
    %v1293 = vadd.f32 %v1168, %v1292
    %1294 = vmatmul.f32.gmra.mxu0 %v649
    %v1295 = vpop.f32.mrf.mxu0
    %v1296 = vadd.f32 %v1168, %v1295
    %1297 = vdwg.mxu0
    %1298 = vmatpush.msra.mxu0 %v902
    %1299 = vmatpush.msra.mxu0 %v894
    %1300 = vmatpush.msra.mxu0 %v886
    %1301 = vmatpush.msra.mxu0 %v878
    %1302 = vmatpush.msra.mxu0 %v870
    %1303 = vmatpush.msra.mxu0 %v862
    %1304 = vmatpush.msra.mxu0 %v854
    %1305 = vmatpush.msra.mxu0 %v846
    %1306 = vmatpush.msra.mxu0 %v838
    %1307 = vmatpush.msra.mxu0 %v830
    %1308 = vmatpush.msra.mxu0 %v822
    %1309 = vmatpush.msra.mxu0 %v814
    %1310 = vmatpush.msra.mxu0 %v806
    %1311 = vmatpush.msra.mxu0 %v798
    %1312 = vmatpush.msra.mxu0 %v790
    %1313 = vmatpush.msra.mxu0 %v782
    %1314 = vmatmul.f32.gmra.mxu0 %v646
    %v1315 = vpop.f32.mrf.mxu0
    %v1316 = vadd.f32 %v1293, %v1315
    %1317 = vmatmul.f32.gmra.mxu0 %v650
    %v1318 = vpop.f32.mrf.mxu0
    %v1319 = vadd.f32 %v1296, %v1318
    %1320 = vdwg.mxu0
    %1321 = vmatpush.msra.mxu0 %v1030
    %1322 = vmatpush.msra.mxu0 %v1022
    %1323 = vmatpush.msra.mxu0 %v1014
    %1324 = vmatpush.msra.mxu0 %v1006
    %1325 = vmatpush.msra.mxu0 %v998
    %1326 = vmatpush.msra.mxu0 %v990
    %1327 = vmatpush.msra.mxu0 %v982
    %1328 = vmatpush.msra.mxu0 %v974
    %1329 = vmatpush.msra.mxu0 %v966
    %1330 = vmatpush.msra.mxu0 %v958
    %1331 = vmatpush.msra.mxu0 %v950
    %1332 = vmatpush.msra.mxu0 %v942
    %1333 = vmatpush.msra.mxu0 %v934
    %1334 = vmatpush.msra.mxu0 %v926
    %1335 = vmatpush.msra.mxu0 %v918
    %1336 = vmatpush.msra.mxu0 %v910
    %1337 = vmatmul.f32.gmra.mxu0 %v647
    %v1338 = vpop.f32.mrf.mxu0
    %v1339 = vadd.f32 %v1316, %v1338
    %1340 = vmatmul.f32.gmra.mxu0 %v651
    %v1341 = vpop.f32.mrf.mxu0
    %v1342 = vadd.f32 %v1319, %v1341
    %1343 = vdwg.mxu0
    %1344 = vmatpush.msra.mxu0 %v1158
    %1345 = vmatpush.msra.mxu0 %v1150
    %1346 = vmatpush.msra.mxu0 %v1142
    %1347 = vmatpush.msra.mxu0 %v1134
    %1348 = vmatpush.msra.mxu0 %v1126
    %1349 = vmatpush.msra.mxu0 %v1118
    %1350 = vmatpush.msra.mxu0 %v1110
    %1351 = vmatpush.msra.mxu0 %v1102
    %1352 = vmatpush.msra.mxu0 %v1094
    %1353 = vmatpush.msra.mxu0 %v1086
    %1354 = vmatpush.msra.mxu0 %v1078
    %1355 = vmatpush.msra.mxu0 %v1070
    %1356 = vmatpush.msra.mxu0 %v1062
    %1357 = vmatpush.msra.mxu0 %v1054
    %1358 = vmatpush.msra.mxu0 %v1046
    %1359 = vmatpush.msra.mxu0 %v1038
    %1360 = vmatmul.f32.gmra.mxu0 %v648
    %v1361 = vpop.f32.mrf.mxu0
    %v1362 = vadd.f32 %v1339, %v1361
    %1363 = vmatmul.f32.gmra.mxu0 %v652
    %v1364 = vpop.f32.mrf.mxu0
    %v1365 = vadd.f32 %v1342, %v1364
    %1366 = vdwg.mxu0
    %1367 = vmatpush.msra.mxu0 %v775
    %1368 = vmatpush.msra.mxu0 %v767
    %1369 = vmatpush.msra.mxu0 %v759
    %1370 = vmatpush.msra.mxu0 %v751
    %1371 = vmatpush.msra.mxu0 %v743
    %1372 = vmatpush.msra.mxu0 %v735
    %1373 = vmatpush.msra.mxu0 %v727
    %1374 = vmatpush.msra.mxu0 %v719
    %1375 = vmatpush.msra.mxu0 %v711
    %1376 = vmatpush.msra.mxu0 %v703
    %1377 = vmatpush.msra.mxu0 %v695
    %1378 = vmatpush.msra.mxu0 %v687
    %1379 = vmatpush.msra.mxu0 %v679
    %1380 = vmatpush.msra.mxu0 %v671
    %1381 = vmatpush.msra.mxu0 %v663
    %1382 = vmatpush.msra.mxu0 %v655
    %1383 = vmatmul.f32.gmra.mxu0 %v645
    %v1384 = vpop.f32.mrf.mxu0
    %v1385 = vadd.f32 %v1169, %v1384
    %1386 = vmatmul.f32.gmra.mxu0 %v649
    %v1387 = vpop.f32.mrf.mxu0
    %v1388 = vadd.f32 %v1169, %v1387
    %1389 = vdwg.mxu0
    %1390 = vmatpush.msra.mxu0 %v903
    %1391 = vmatpush.msra.mxu0 %v895
    %1392 = vmatpush.msra.mxu0 %v887
    %1393 = vmatpush.msra.mxu0 %v879
    %1394 = vmatpush.msra.mxu0 %v871
    %1395 = vmatpush.msra.mxu0 %v863
    %1396 = vmatpush.msra.mxu0 %v855
    %1397 = vmatpush.msra.mxu0 %v847
    %1398 = vmatpush.msra.mxu0 %v839
    %1399 = vmatpush.msra.mxu0 %v831
    %1400 = vmatpush.msra.mxu0 %v823
    %1401 = vmatpush.msra.mxu0 %v815
    %1402 = vmatpush.msra.mxu0 %v807
    %1403 = vmatpush.msra.mxu0 %v799
    %1404 = vmatpush.msra.mxu0 %v791
    %1405 = vmatpush.msra.mxu0 %v783
    %1406 = vmatmul.f32.gmra.mxu0 %v646
    %v1407 = vpop.f32.mrf.mxu0
    %v1408 = vadd.f32 %v1385, %v1407
    %1409 = vmatmul.f32.gmra.mxu0 %v650
    %v1410 = vpop.f32.mrf.mxu0
    %v1411 = vadd.f32 %v1388, %v1410
    %1412 = vdwg.mxu0
    %1413 = vmatpush.msra.mxu0 %v1031
    %1414 = vmatpush.msra.mxu0 %v1023
    %1415 = vmatpush.msra.mxu0 %v1015
    %1416 = vmatpush.msra.mxu0 %v1007
    %1417 = vmatpush.msra.mxu0 %v999
    %1418 = vmatpush.msra.mxu0 %v991
    %1419 = vmatpush.msra.mxu0 %v983
    %1420 = vmatpush.msra.mxu0 %v975
    %1421 = vmatpush.msra.mxu0 %v967
    %1422 = vmatpush.msra.mxu0 %v959
    %1423 = vmatpush.msra.mxu0 %v951
    %1424 = vmatpush.msra.mxu0 %v943
    %1425 = vmatpush.msra.mxu0 %v935
    %1426 = vmatpush.msra.mxu0 %v927
    %1427 = vmatpush.msra.mxu0 %v919
    %1428 = vmatpush.msra.mxu0 %v911
    %1429 = vmatmul.f32.gmra.mxu0 %v647
    %v1430 = vpop.f32.mrf.mxu0
    %v1431 = vadd.f32 %v1408, %v1430
    %1432 = vmatmul.f32.gmra.mxu0 %v651
    %v1433 = vpop.f32.mrf.mxu0
    %v1434 = vadd.f32 %v1411, %v1433
    %1435 = vdwg.mxu0
    %1436 = vmatpush.msra.mxu0 %v1159
    %1437 = vmatpush.msra.mxu0 %v1151
    %1438 = vmatpush.msra.mxu0 %v1143
    %1439 = vmatpush.msra.mxu0 %v1135
    %1440 = vmatpush.msra.mxu0 %v1127
    %1441 = vmatpush.msra.mxu0 %v1119
    %1442 = vmatpush.msra.mxu0 %v1111
    %1443 = vmatpush.msra.mxu0 %v1103
    %1444 = vmatpush.msra.mxu0 %v1095
    %1445 = vmatpush.msra.mxu0 %v1087
    %1446 = vmatpush.msra.mxu0 %v1079
    %1447 = vmatpush.msra.mxu0 %v1071
    %1448 = vmatpush.msra.mxu0 %v1063
    %1449 = vmatpush.msra.mxu0 %v1055
    %1450 = vmatpush.msra.mxu0 %v1047
    %1451 = vmatpush.msra.mxu0 %v1039
    %1452 = vmatmul.f32.gmra.mxu0 %v648
    %v1453 = vpop.f32.mrf.mxu0
    %v1454 = vadd.f32 %v1431, %v1453
    %1455 = vmatmul.f32.gmra.mxu0 %v652
    %v1456 = vpop.f32.mrf.mxu0
    %v1457 = vadd.f32 %v1434, %v1456
    %1458 = vdwg.mxu0
    %1459 = vmatpush.msra.mxu0 %v776
    %1460 = vmatpush.msra.mxu0 %v768
    %1461 = vmatpush.msra.mxu0 %v760
    %1462 = vmatpush.msra.mxu0 %v752
    %1463 = vmatpush.msra.mxu0 %v744
    %1464 = vmatpush.msra.mxu0 %v736
    %1465 = vmatpush.msra.mxu0 %v728
    %1466 = vmatpush.msra.mxu0 %v720
    %1467 = vmatpush.msra.mxu0 %v712
    %1468 = vmatpush.msra.mxu0 %v704
    %1469 = vmatpush.msra.mxu0 %v696
    %1470 = vmatpush.msra.mxu0 %v688
    %1471 = vmatpush.msra.mxu0 %v680
    %1472 = vmatpush.msra.mxu0 %v672
    %1473 = vmatpush.msra.mxu0 %v664
    %1474 = vmatpush.msra.mxu0 %v656
    %1475 = vmatmul.f32.gmra.mxu0 %v645
    %v1476 = vpop.f32.mrf.mxu0
    %v1477 = vadd.f32 %v1170, %v1476
    %1478 = vmatmul.f32.gmra.mxu0 %v649
    %v1479 = vpop.f32.mrf.mxu0
    %v1480 = vadd.f32 %v1170, %v1479
    %1481 = vdwg.mxu0
    %1482 = vmatpush.msra.mxu0 %v904
    %1483 = vmatpush.msra.mxu0 %v896
    %1484 = vmatpush.msra.mxu0 %v888
    %1485 = vmatpush.msra.mxu0 %v880
    %1486 = vmatpush.msra.mxu0 %v872
    %1487 = vmatpush.msra.mxu0 %v864
    %1488 = vmatpush.msra.mxu0 %v856
    %1489 = vmatpush.msra.mxu0 %v848
    %1490 = vmatpush.msra.mxu0 %v840
    %1491 = vmatpush.msra.mxu0 %v832
    %1492 = vmatpush.msra.mxu0 %v824
    %1493 = vmatpush.msra.mxu0 %v816
    %1494 = vmatpush.msra.mxu0 %v808
    %1495 = vmatpush.msra.mxu0 %v800
    %1496 = vmatpush.msra.mxu0 %v792
    %1497 = vmatpush.msra.mxu0 %v784
    %1498 = vmatmul.f32.gmra.mxu0 %v646
    %v1499 = vpop.f32.mrf.mxu0
    %v1500 = vadd.f32 %v1477, %v1499
    %1501 = vmatmul.f32.gmra.mxu0 %v650
    %v1502 = vpop.f32.mrf.mxu0
    %v1503 = vadd.f32 %v1480, %v1502
    %1504 = vdwg.mxu0
    %1505 = vmatpush.msra.mxu0 %v1032
    %1506 = vmatpush.msra.mxu0 %v1024
    %1507 = vmatpush.msra.mxu0 %v1016
    %1508 = vmatpush.msra.mxu0 %v1008
    %1509 = vmatpush.msra.mxu0 %v1000
    %1510 = vmatpush.msra.mxu0 %v992
    %1511 = vmatpush.msra.mxu0 %v984
    %1512 = vmatpush.msra.mxu0 %v976
    %1513 = vmatpush.msra.mxu0 %v968
    %1514 = vmatpush.msra.mxu0 %v960
    %1515 = vmatpush.msra.mxu0 %v952
    %1516 = vmatpush.msra.mxu0 %v944
    %1517 = vmatpush.msra.mxu0 %v936
    %1518 = vmatpush.msra.mxu0 %v928
    %1519 = vmatpush.msra.mxu0 %v920
    %1520 = vmatpush.msra.mxu0 %v912
    %1521 = vmatmul.f32.gmra.mxu0 %v647
    %v1522 = vpop.f32.mrf.mxu0
    %v1523 = vadd.f32 %v1500, %v1522
    %1524 = vmatmul.f32.gmra.mxu0 %v651
    %v1525 = vpop.f32.mrf.mxu0
    %v1526 = vadd.f32 %v1503, %v1525
    %1527 = vdwg.mxu0
    %1528 = vmatpush.msra.mxu0 %v1160
    %1529 = vmatpush.msra.mxu0 %v1152
    %1530 = vmatpush.msra.mxu0 %v1144
    %1531 = vmatpush.msra.mxu0 %v1136
    %1532 = vmatpush.msra.mxu0 %v1128
    %1533 = vmatpush.msra.mxu0 %v1120
    %1534 = vmatpush.msra.mxu0 %v1112
    %1535 = vmatpush.msra.mxu0 %v1104
    %1536 = vmatpush.msra.mxu0 %v1096
    %1537 = vmatpush.msra.mxu0 %v1088
    %1538 = vmatpush.msra.mxu0 %v1080
    %1539 = vmatpush.msra.mxu0 %v1072
    %1540 = vmatpush.msra.mxu0 %v1064
    %1541 = vmatpush.msra.mxu0 %v1056
    %1542 = vmatpush.msra.mxu0 %v1048
    %1543 = vmatpush.msra.mxu0 %v1040
    %1544 = vmatmul.f32.gmra.mxu0 %v648
    %v1545 = vpop.f32.mrf.mxu0
    %v1546 = vadd.f32 %v1523, %v1545
    %1547 = vmatmul.f32.gmra.mxu0 %v652
    %v1548 = vpop.f32.mrf.mxu0
    %v1549 = vadd.f32 %v1526, %v1548
    %1550 = vdwg.mxu0
    %1551 = vmatpush.msra.mxu0 %v777
    %1552 = vmatpush.msra.mxu0 %v769
    %1553 = vmatpush.msra.mxu0 %v761
    %1554 = vmatpush.msra.mxu0 %v753
    %1555 = vmatpush.msra.mxu0 %v745
    %1556 = vmatpush.msra.mxu0 %v737
    %1557 = vmatpush.msra.mxu0 %v729
    %1558 = vmatpush.msra.mxu0 %v721
    %1559 = vmatpush.msra.mxu0 %v713
    %1560 = vmatpush.msra.mxu0 %v705
    %1561 = vmatpush.msra.mxu0 %v697
    %1562 = vmatpush.msra.mxu0 %v689
    %1563 = vmatpush.msra.mxu0 %v681
    %1564 = vmatpush.msra.mxu0 %v673
    %1565 = vmatpush.msra.mxu0 %v665
    %1566 = vmatpush.msra.mxu0 %v657
    %1567 = vmatmul.f32.gmra.mxu0 %v645
    %v1568 = vpop.f32.mrf.mxu0
    %v1569 = vadd.f32 %v1171, %v1568
    %1570 = vmatmul.f32.gmra.mxu0 %v649
    %v1571 = vpop.f32.mrf.mxu0
    %v1572 = vadd.f32 %v1171, %v1571
    %1573 = vdwg.mxu0
    %1574 = vmatpush.msra.mxu0 %v905
    %1575 = vmatpush.msra.mxu0 %v897
    %1576 = vmatpush.msra.mxu0 %v889
    %1577 = vmatpush.msra.mxu0 %v881
    %1578 = vmatpush.msra.mxu0 %v873
    %1579 = vmatpush.msra.mxu0 %v865
    %1580 = vmatpush.msra.mxu0 %v857
    %1581 = vmatpush.msra.mxu0 %v849
    %1582 = vmatpush.msra.mxu0 %v841
    %1583 = vmatpush.msra.mxu0 %v833
    %1584 = vmatpush.msra.mxu0 %v825
    %1585 = vmatpush.msra.mxu0 %v817
    %1586 = vmatpush.msra.mxu0 %v809
    %1587 = vmatpush.msra.mxu0 %v801
    %1588 = vmatpush.msra.mxu0 %v793
    %1589 = vmatpush.msra.mxu0 %v785
    %1590 = vmatmul.f32.gmra.mxu0 %v646
    %v1591 = vpop.f32.mrf.mxu0
    %v1592 = vadd.f32 %v1569, %v1591
    %1593 = vmatmul.f32.gmra.mxu0 %v650
    %v1594 = vpop.f32.mrf.mxu0
    %v1595 = vadd.f32 %v1572, %v1594
    %1596 = vdwg.mxu0
    %1597 = vmatpush.msra.mxu0 %v1033
    %1598 = vmatpush.msra.mxu0 %v1025
    %1599 = vmatpush.msra.mxu0 %v1017
    %1600 = vmatpush.msra.mxu0 %v1009
    %1601 = vmatpush.msra.mxu0 %v1001
    %1602 = vmatpush.msra.mxu0 %v993
    %1603 = vmatpush.msra.mxu0 %v985
    %1604 = vmatpush.msra.mxu0 %v977
    %1605 = vmatpush.msra.mxu0 %v969
    %1606 = vmatpush.msra.mxu0 %v961
    %1607 = vmatpush.msra.mxu0 %v953
    %1608 = vmatpush.msra.mxu0 %v945
    %1609 = vmatpush.msra.mxu0 %v937
    %1610 = vmatpush.msra.mxu0 %v929
    %1611 = vmatpush.msra.mxu0 %v921
    %1612 = vmatpush.msra.mxu0 %v913
    %1613 = vmatmul.f32.gmra.mxu0 %v647
    %v1614 = vpop.f32.mrf.mxu0
    %v1615 = vadd.f32 %v1592, %v1614
    %1616 = vmatmul.f32.gmra.mxu0 %v651
    %v1617 = vpop.f32.mrf.mxu0
    %v1618 = vadd.f32 %v1595, %v1617
    %1619 = vdwg.mxu0
    %1620 = vmatpush.msra.mxu0 %v1161
    %1621 = vmatpush.msra.mxu0 %v1153
    %1622 = vmatpush.msra.mxu0 %v1145
    %1623 = vmatpush.msra.mxu0 %v1137
    %1624 = vmatpush.msra.mxu0 %v1129
    %1625 = vmatpush.msra.mxu0 %v1121
    %1626 = vmatpush.msra.mxu0 %v1113
    %1627 = vmatpush.msra.mxu0 %v1105
    %1628 = vmatpush.msra.mxu0 %v1097
    %1629 = vmatpush.msra.mxu0 %v1089
    %1630 = vmatpush.msra.mxu0 %v1081
    %1631 = vmatpush.msra.mxu0 %v1073
    %1632 = vmatpush.msra.mxu0 %v1065
    %1633 = vmatpush.msra.mxu0 %v1057
    %1634 = vmatpush.msra.mxu0 %v1049
    %1635 = vmatpush.msra.mxu0 %v1041
    %1636 = vmatmul.f32.gmra.mxu0 %v648
    %v1637 = vpop.f32.mrf.mxu0
    %v1638 = vadd.f32 %v1615, %v1637
    %1639 = vmatmul.f32.gmra.mxu0 %v652
    %v1640 = vpop.f32.mrf.mxu0
    %v1641 = vadd.f32 %v1618, %v1640
    %1642 = vdwg.mxu0
    %1643 = vmatpush.msra.mxu0 %v778
    %1644 = vmatpush.msra.mxu0 %v770
    %1645 = vmatpush.msra.mxu0 %v762
    %1646 = vmatpush.msra.mxu0 %v754
    %1647 = vmatpush.msra.mxu0 %v746
    %1648 = vmatpush.msra.mxu0 %v738
    %1649 = vmatpush.msra.mxu0 %v730
    %1650 = vmatpush.msra.mxu0 %v722
    %1651 = vmatpush.msra.mxu0 %v714
    %1652 = vmatpush.msra.mxu0 %v706
    %1653 = vmatpush.msra.mxu0 %v698
    %1654 = vmatpush.msra.mxu0 %v690
    %1655 = vmatpush.msra.mxu0 %v682
    %1656 = vmatpush.msra.mxu0 %v674
    %1657 = vmatpush.msra.mxu0 %v666
    %1658 = vmatpush.msra.mxu0 %v658
    %1659 = vmatmul.f32.gmra.mxu0 %v645
    %v1660 = vpop.f32.mrf.mxu0
    %v1661 = vadd.f32 %v1172, %v1660
    %1662 = vmatmul.f32.gmra.mxu0 %v649
    %v1663 = vpop.f32.mrf.mxu0
    %v1664 = vadd.f32 %v1172, %v1663
    %1665 = vdwg.mxu0
    %1666 = vmatpush.msra.mxu0 %v906
    %1667 = vmatpush.msra.mxu0 %v898
    %1668 = vmatpush.msra.mxu0 %v890
    %1669 = vmatpush.msra.mxu0 %v882
    %1670 = vmatpush.msra.mxu0 %v874
    %1671 = vmatpush.msra.mxu0 %v866
    %1672 = vmatpush.msra.mxu0 %v858
    %1673 = vmatpush.msra.mxu0 %v850
    %1674 = vmatpush.msra.mxu0 %v842
    %1675 = vmatpush.msra.mxu0 %v834
    %1676 = vmatpush.msra.mxu0 %v826
    %1677 = vmatpush.msra.mxu0 %v818
    %1678 = vmatpush.msra.mxu0 %v810
    %1679 = vmatpush.msra.mxu0 %v802
    %1680 = vmatpush.msra.mxu0 %v794
    %1681 = vmatpush.msra.mxu0 %v786
    %1682 = vmatmul.f32.gmra.mxu0 %v646
    %v1683 = vpop.f32.mrf.mxu0
    %v1684 = vadd.f32 %v1661, %v1683
    %1685 = vmatmul.f32.gmra.mxu0 %v650
    %v1686 = vpop.f32.mrf.mxu0
    %v1687 = vadd.f32 %v1664, %v1686
    %1688 = vdwg.mxu0
    %1689 = vmatpush.msra.mxu0 %v1034
    %1690 = vmatpush.msra.mxu0 %v1026
    %1691 = vmatpush.msra.mxu0 %v1018
    %1692 = vmatpush.msra.mxu0 %v1010
    %1693 = vmatpush.msra.mxu0 %v1002
    %1694 = vmatpush.msra.mxu0 %v994
    %1695 = vmatpush.msra.mxu0 %v986
    %1696 = vmatpush.msra.mxu0 %v978
    %1697 = vmatpush.msra.mxu0 %v970
    %1698 = vmatpush.msra.mxu0 %v962
    %1699 = vmatpush.msra.mxu0 %v954
    %1700 = vmatpush.msra.mxu0 %v946
    %1701 = vmatpush.msra.mxu0 %v938
    %1702 = vmatpush.msra.mxu0 %v930
    %1703 = vmatpush.msra.mxu0 %v922
    %1704 = vmatpush.msra.mxu0 %v914
    %1705 = vmatmul.f32.gmra.mxu0 %v647
    %v1706 = vpop.f32.mrf.mxu0
    %v1707 = vadd.f32 %v1684, %v1706
    %1708 = vmatmul.f32.gmra.mxu0 %v651
    %v1709 = vpop.f32.mrf.mxu0
    %v1710 = vadd.f32 %v1687, %v1709
    %1711 = vdwg.mxu0
    %1712 = vmatpush.msra.mxu0 %v1162
    %1713 = vmatpush.msra.mxu0 %v1154
    %1714 = vmatpush.msra.mxu0 %v1146
    %1715 = vmatpush.msra.mxu0 %v1138
    %1716 = vmatpush.msra.mxu0 %v1130
    %1717 = vmatpush.msra.mxu0 %v1122
    %1718 = vmatpush.msra.mxu0 %v1114
    %1719 = vmatpush.msra.mxu0 %v1106
    %1720 = vmatpush.msra.mxu0 %v1098
    %1721 = vmatpush.msra.mxu0 %v1090
    %1722 = vmatpush.msra.mxu0 %v1082
    %1723 = vmatpush.msra.mxu0 %v1074
    %1724 = vmatpush.msra.mxu0 %v1066
    %1725 = vmatpush.msra.mxu0 %v1058
    %1726 = vmatpush.msra.mxu0 %v1050
    %1727 = vmatpush.msra.mxu0 %v1042
    %1728 = vmatmul.f32.gmra.mxu0 %v648
    %v1729 = vpop.f32.mrf.mxu0
    %v1730 = vadd.f32 %v1707, %v1729
    %1731 = vmatmul.f32.gmra.mxu0 %v652
    %v1732 = vpop.f32.mrf.mxu0
    %v1733 = vadd.f32 %v1710, %v1732
    %1734 = vdwg.mxu0
    %1735 = vmatpush.msra.mxu0 %v779
    %1736 = vmatpush.msra.mxu0 %v771
    %1737 = vmatpush.msra.mxu0 %v763
    %1738 = vmatpush.msra.mxu0 %v755
    %1739 = vmatpush.msra.mxu0 %v747
    %1740 = vmatpush.msra.mxu0 %v739
    %1741 = vmatpush.msra.mxu0 %v731
    %1742 = vmatpush.msra.mxu0 %v723
    %1743 = vmatpush.msra.mxu0 %v715
    %1744 = vmatpush.msra.mxu0 %v707
    %1745 = vmatpush.msra.mxu0 %v699
    %1746 = vmatpush.msra.mxu0 %v691
    %1747 = vmatpush.msra.mxu0 %v683
    %1748 = vmatpush.msra.mxu0 %v675
    %1749 = vmatpush.msra.mxu0 %v667
    %1750 = vmatpush.msra.mxu0 %v659
    %1751 = vmatmul.f32.gmra.mxu0 %v645
    %v1752 = vpop.f32.mrf.mxu0
    %v1753 = vadd.f32 %v1173, %v1752
    %1754 = vmatmul.f32.gmra.mxu0 %v649
    %v1755 = vpop.f32.mrf.mxu0
    %v1756 = vadd.f32 %v1173, %v1755
    %1757 = vdwg.mxu0
    %1758 = vmatpush.msra.mxu0 %v907
    %1759 = vmatpush.msra.mxu0 %v899
    %1760 = vmatpush.msra.mxu0 %v891
    %1761 = vmatpush.msra.mxu0 %v883
    %1762 = vmatpush.msra.mxu0 %v875
    %1763 = vmatpush.msra.mxu0 %v867
    %1764 = vmatpush.msra.mxu0 %v859
    %1765 = vmatpush.msra.mxu0 %v851
    %1766 = vmatpush.msra.mxu0 %v843
    %1767 = vmatpush.msra.mxu0 %v835
    %1768 = vmatpush.msra.mxu0 %v827
    %1769 = vmatpush.msra.mxu0 %v819
    %1770 = vmatpush.msra.mxu0 %v811
    %1771 = vmatpush.msra.mxu0 %v803
    %1772 = vmatpush.msra.mxu0 %v795
    %1773 = vmatpush.msra.mxu0 %v787
    %1774 = vmatmul.f32.gmra.mxu0 %v646
    %v1775 = vpop.f32.mrf.mxu0
    %v1776 = vadd.f32 %v1753, %v1775
    %1777 = vmatmul.f32.gmra.mxu0 %v650
    %v1778 = vpop.f32.mrf.mxu0
    %v1779 = vadd.f32 %v1756, %v1778
    %1780 = vdwg.mxu0
    %1781 = vmatpush.msra.mxu0 %v1035
    %1782 = vmatpush.msra.mxu0 %v1027
    %1783 = vmatpush.msra.mxu0 %v1019
    %1784 = vmatpush.msra.mxu0 %v1011
    %1785 = vmatpush.msra.mxu0 %v1003
    %1786 = vmatpush.msra.mxu0 %v995
    %1787 = vmatpush.msra.mxu0 %v987
    %1788 = vmatpush.msra.mxu0 %v979
    %1789 = vmatpush.msra.mxu0 %v971
    %1790 = vmatpush.msra.mxu0 %v963
    %1791 = vmatpush.msra.mxu0 %v955
    %1792 = vmatpush.msra.mxu0 %v947
    %1793 = vmatpush.msra.mxu0 %v939
    %1794 = vmatpush.msra.mxu0 %v931
    %1795 = vmatpush.msra.mxu0 %v923
    %1796 = vmatpush.msra.mxu0 %v915
    %1797 = vmatmul.f32.gmra.mxu0 %v647
    %v1798 = vpop.f32.mrf.mxu0
    %v1799 = vadd.f32 %v1776, %v1798
    %1800 = vmatmul.f32.gmra.mxu0 %v651
    %v1801 = vpop.f32.mrf.mxu0
    %v1802 = vadd.f32 %v1779, %v1801
    %1803 = vdwg.mxu0
    %1804 = vmatpush.msra.mxu0 %v1163
    %1805 = vmatpush.msra.mxu0 %v1155
    %1806 = vmatpush.msra.mxu0 %v1147
    %1807 = vmatpush.msra.mxu0 %v1139
    %1808 = vmatpush.msra.mxu0 %v1131
    %1809 = vmatpush.msra.mxu0 %v1123
    %1810 = vmatpush.msra.mxu0 %v1115
    %1811 = vmatpush.msra.mxu0 %v1107
    %1812 = vmatpush.msra.mxu0 %v1099
    %1813 = vmatpush.msra.mxu0 %v1091
    %1814 = vmatpush.msra.mxu0 %v1083
    %1815 = vmatpush.msra.mxu0 %v1075
    %1816 = vmatpush.msra.mxu0 %v1067
    %1817 = vmatpush.msra.mxu0 %v1059
    %1818 = vmatpush.msra.mxu0 %v1051
    %1819 = vmatpush.msra.mxu0 %v1043
    %1820 = vmatmul.f32.gmra.mxu0 %v648
    %v1821 = vpop.f32.mrf.mxu0
    %v1822 = vadd.f32 %v1799, %v1821
    %1823 = vmatmul.f32.gmra.mxu0 %v652
    %v1824 = vpop.f32.mrf.mxu0
    %v1825 = vadd.f32 %v1802, %v1824
    %1826 = vdwg.mxu0
    %1827 = vmatpush.msra.mxu0 %v780
    %1828 = vmatpush.msra.mxu0 %v772
    %1829 = vmatpush.msra.mxu0 %v764
    %1830 = vmatpush.msra.mxu0 %v756
    %1831 = vmatpush.msra.mxu0 %v748
    %1832 = vmatpush.msra.mxu0 %v740
    %1833 = vmatpush.msra.mxu0 %v732
    %1834 = vmatpush.msra.mxu0 %v724
    %1835 = vmatpush.msra.mxu0 %v716
    %1836 = vmatpush.msra.mxu0 %v708
    %1837 = vmatpush.msra.mxu0 %v700
    %1838 = vmatpush.msra.mxu0 %v692
    %1839 = vmatpush.msra.mxu0 %v684
    %1840 = vmatpush.msra.mxu0 %v676
    %1841 = vmatpush.msra.mxu0 %v668
    %1842 = vmatpush.msra.mxu0 %v660
    %1843 = vmatmul.f32.gmra.mxu0 %v645
    %v1844 = vpop.f32.mrf.mxu0
    %v1845 = vadd.f32 %v1174, %v1844
    %1846 = vmatmul.f32.gmra.mxu0 %v649
    %v1847 = vpop.f32.mrf.mxu0
    %v1848 = vadd.f32 %v1174, %v1847
    %1849 = vdwg.mxu0
    %1850 = vmatpush.msra.mxu0 %v908
    %1851 = vmatpush.msra.mxu0 %v900
    %1852 = vmatpush.msra.mxu0 %v892
    %1853 = vmatpush.msra.mxu0 %v884
    %1854 = vmatpush.msra.mxu0 %v876
    %1855 = vmatpush.msra.mxu0 %v868
    %1856 = vmatpush.msra.mxu0 %v860
    %1857 = vmatpush.msra.mxu0 %v852
    %1858 = vmatpush.msra.mxu0 %v844
    %1859 = vmatpush.msra.mxu0 %v836
    %1860 = vmatpush.msra.mxu0 %v828
    %1861 = vmatpush.msra.mxu0 %v820
    %1862 = vmatpush.msra.mxu0 %v812
    %1863 = vmatpush.msra.mxu0 %v804
    %1864 = vmatpush.msra.mxu0 %v796
    %1865 = vmatpush.msra.mxu0 %v788
    %1866 = vmatmul.f32.gmra.mxu0 %v646
    %v1867 = vpop.f32.mrf.mxu0
    %v1868 = vadd.f32 %v1845, %v1867
    %1869 = vmatmul.f32.gmra.mxu0 %v650
    %v1870 = vpop.f32.mrf.mxu0
    %v1871 = vadd.f32 %v1848, %v1870
    %1872 = vdwg.mxu0
    %1873 = vmatpush.msra.mxu0 %v1036
    %1874 = vmatpush.msra.mxu0 %v1028
    %1875 = vmatpush.msra.mxu0 %v1020
    %1876 = vmatpush.msra.mxu0 %v1012
    %1877 = vmatpush.msra.mxu0 %v1004
    %1878 = vmatpush.msra.mxu0 %v996
    %1879 = vmatpush.msra.mxu0 %v988
    %1880 = vmatpush.msra.mxu0 %v980
    %1881 = vmatpush.msra.mxu0 %v972
    %1882 = vmatpush.msra.mxu0 %v964
    %1883 = vmatpush.msra.mxu0 %v956
    %1884 = vmatpush.msra.mxu0 %v948
    %1885 = vmatpush.msra.mxu0 %v940
    %1886 = vmatpush.msra.mxu0 %v932
    %1887 = vmatpush.msra.mxu0 %v924
    %1888 = vmatpush.msra.mxu0 %v916
    %1889 = vmatmul.f32.gmra.mxu0 %v647
    %v1890 = vpop.f32.mrf.mxu0
    %v1891 = vadd.f32 %v1868, %v1890
    %1892 = vmatmul.f32.gmra.mxu0 %v651
    %v1893 = vpop.f32.mrf.mxu0
    %v1894 = vadd.f32 %v1871, %v1893
    %1895 = vdwg.mxu0
    %1896 = vmatpush.msra.mxu0 %v1164
    %1897 = vmatpush.msra.mxu0 %v1156
    %1898 = vmatpush.msra.mxu0 %v1148
    %1899 = vmatpush.msra.mxu0 %v1140
    %1900 = vmatpush.msra.mxu0 %v1132
    %1901 = vmatpush.msra.mxu0 %v1124
    %1902 = vmatpush.msra.mxu0 %v1116
    %1903 = vmatpush.msra.mxu0 %v1108
    %1904 = vmatpush.msra.mxu0 %v1100
    %1905 = vmatpush.msra.mxu0 %v1092
    %1906 = vmatpush.msra.mxu0 %v1084
    %1907 = vmatpush.msra.mxu0 %v1076
    %1908 = vmatpush.msra.mxu0 %v1068
    %1909 = vmatpush.msra.mxu0 %v1060
    %1910 = vmatpush.msra.mxu0 %v1052
    %1911 = vmatpush.msra.mxu0 %v1044
    %1912 = vmatmul.f32.gmra.mxu0 %v648
    %v1913 = vpop.f32.mrf.mxu0
    %v1914 = vadd.f32 %v1891, %v1913
    %1915 = vmatmul.f32.gmra.mxu0 %v652
    %v1916 = vpop.f32.mrf.mxu0
    %v1917 = vadd.f32 %v1894, %v1916
    %1918 = vdwg.mxu0
    %vm1919 = vcmp.gt.f32.partialorder %v1270, 0.0
    %vm1920 = vcmp.gt.f32.partialorder %v1362, 0.0
    %vm1921 = vcmp.gt.f32.partialorder %v1454, 0.0
    %vm1922 = vcmp.gt.f32.partialorder %v1546, 0.0
    %vm1923 = vcmp.gt.f32.partialorder %v1638, 0.0
    %vm1924 = vcmp.gt.f32.partialorder %v1730, 0.0
    %vm1925 = vcmp.gt.f32.partialorder %v1822, 0.0
    %vm1926 = vcmp.gt.f32.partialorder %v1914, 0.0
    %vm1927 = vcmp.gt.f32.partialorder %v1273, 0.0
    %vm1928 = vcmp.gt.f32.partialorder %v1365, 0.0
    %vm1929 = vcmp.gt.f32.partialorder %v1457, 0.0
    %vm1930 = vcmp.gt.f32.partialorder %v1549, 0.0
    %vm1931 = vcmp.gt.f32.partialorder %v1641, 0.0
    %vm1932 = vcmp.gt.f32.partialorder %v1733, 0.0
    %vm1933 = vcmp.gt.f32.partialorder %v1825, 0.0
    %vm1934 = vcmp.gt.f32.partialorder %v1917, 0.0
    %v1935 = vmul.f32 %v1270, 0.01
    %v1936 = vmul.f32 %v1362, 0.01
    %v1937 = vmul.f32 %v1454, 0.01
    %v1938 = vmul.f32 %v1546, 0.01
    %v1939 = vmul.f32 %v1638, 0.01
    %v1940 = vmul.f32 %v1730, 0.01
    %v1941 = vmul.f32 %v1822, 0.01
    %v1942 = vmul.f32 %v1914, 0.01
    %v1943 = vmul.f32 %v1273, 0.01
    %v1944 = vmul.f32 %v1365, 0.01
    %v1945 = vmul.f32 %v1457, 0.01
    %v1946 = vmul.f32 %v1549, 0.01
    %v1947 = vmul.f32 %v1641, 0.01
    %v1948 = vmul.f32 %v1733, 0.01
    %v1949 = vmul.f32 %v1825, 0.01
    %v1950 = vmul.f32 %v1917, 0.01
    %v1951 = vsel %vm1919, %v1270, %v1935
    %v1952 = vsel %vm1920, %v1362, %v1936
    %v1953 = vsel %vm1921, %v1454, %v1937
    %v1954 = vsel %vm1922, %v1546, %v1938
    %v1955 = vsel %vm1923, %v1638, %v1939
    %v1956 = vsel %vm1924, %v1730, %v1940
    %v1957 = vsel %vm1925, %v1822, %v1941
    %v1958 = vsel %vm1926, %v1914, %v1942
    %v1959 = vsel %vm1927, %v1273, %v1943
    %v1960 = vsel %vm1928, %v1365, %v1944
    %v1961 = vsel %vm1929, %v1457, %v1945
    %v1962 = vsel %vm1930, %v1549, %v1946
    %v1963 = vsel %vm1931, %v1641, %v1947
    %v1964 = vsel %vm1932, %v1733, %v1948
    %v1965 = vsel %vm1933, %v1825, %v1949
    %v1966 = vsel %vm1934, %v1917, %v1950
    %1967 = vst [vmem:[#allocation17] sm:$0xff] %v1951
    %1968 = vst [vmem:[#allocation17 + $0x8] sm:$0xff] %v1952
    %1969 = vst [vmem:[#allocation17 + $0x10] sm:$0xff] %v1953
    %1970 = vst [vmem:[#allocation17 + $0x18] sm:$0xff] %v1954
    %1971 = vst [vmem:[#allocation17 + $0x20] sm:$0xff] %v1955
    %1972 = vst [vmem:[#allocation17 + $0x28] sm:$0xff] %v1956
    %1973 = vst [vmem:[#allocation17 + $0x30] sm:$0xff] %v1957
    %1974 = vst [vmem:[#allocation17 + $0x38] sm:$0xff] %v1958
    %1975 = vst [vmem:[#allocation17 + $0x40] sm:$0xff] %v1959
    %1976 = vst [vmem:[#allocation17 + $0x48] sm:$0xff] %v1960
    %1977 = vst [vmem:[#allocation17 + $0x50] sm:$0xff] %v1961
    %1978 = vst [vmem:[#allocation17 + $0x58] sm:$0xff] %v1962
    %1979 = vst [vmem:[#allocation17 + $0x60] sm:$0xff] %v1963
    %1980 = vst [vmem:[#allocation17 + $0x68] sm:$0xff] %v1964
    %1981 = vst [vmem:[#allocation17 + $0x70] sm:$0xff] %v1965
    %1982 = vst [vmem:[#allocation17 + $0x78] sm:$0xff] %v1966
    // Predicated region
    $region74: #{tpu_custom_call.1} parent=1 // pred_check
      _
    $region75: #{tpu_custom_call.1} parent=1 // pred_check_branch
      %1984 = sbr.rel (0) target = $region77
    $region76: #{tpu_custom_call.1} parent=1 // pred_region
      %1986 = vsyncadd [#allocation4], 0
      %s1987 = sshll.u32 [#allocation17], 4
      %s1988 = int_to_ptr.vmem [resolvable:$true] %s1987
      %s1989 = sshll.u32 %s9, 4
      %s1990 = int_to_ptr.hbm [resolvable:$true] %s1989
      %1995 = dma.vmem_to_hbm [thread:$0]  %s1988, 2048, %s1990, [#allocation4], 1024, 1024, 64
    $region77: #{tpu_custom_call.1} parent=1 // pred_fallthru
      _
    // Predicated region
    $region78: #{tpu_custom_call.1} parent=1 // pred_check
      _
    $region79: #{tpu_custom_call.1} parent=1 // pred_check_branch
      %1997 = sbr.rel (0) target = $region81
    $region80: #{tpu_custom_call.1} parent=1 // pred_region
      %1999 = dma.done [#allocation4], 2048
    $region81: #{tpu_custom_call.1} parent=1 // pred_fallthru
      _
    %2000 = vsyncpa [#allocation3], 1
    %2001 = vsyncpa [#allocation6], 1
    %2002 = vsyncpa [#allocation9], 1
    %2003 = vsyncpa [#allocation12], 1
    %2004 = vsyncpa [#allocation15], 1
    %2005 = vsyncpa [#allocation4], 1

</llo_original>
